<compile_context>
chip_gen: v6e
topology: v6e:2x2x1
jax: 0.10.0
libtpu: 0.0.40
codegen_flags: <defaults>
</compile_context>

<pallas_src>
import functools

import jax
import jax.numpy as jnp
from jax import lax
from jax.experimental import pallas as pl
from jax.experimental.pallas import tpu as pltpu

PAD_ID, BOS_ID, EOS_ID = 0, 1, 2
LANE = 128
_VMEM_TILE_BUDGET = 36 << 20          # keep well under v7x's 64 MiB physical VMEM


def _fused_vmem_bytes(R, H, TV):
    """Rough double-buffered VMEM footprint of the fused kernel."""
    return (2 * (R * H * 2)               # h tile (bf16)
            + 2 * (H * TV * 2)            # weight tile (bf16) -- dominant
            + 2 * (TV * 4)                # bias tile
            + 2 * (R * 4)                 # prev-token tile
            + 2 * 2 * (R * LANE * 4)      # vals + idxs accumulators
            + 2 * (R * 4) * 2)            # LSE scratch (m, s)


def _pick_vocab_tile(V, R, H, cap=None, budget=_VMEM_TILE_BUDGET):
    """Largest vocab tile (multiple of 128, divisor of V) fitting the budget."""
    for tv in (8192, 4096, 2048, 1024, 512, 256, 128):
        if cap is not None and tv > cap:
            continue
        if tv <= V and V % tv == 0 and _fused_vmem_bytes(R, H, tv) <= budget:
            return tv
    return V                               # full-dim block is always legal


# ---------------------------------------------------------------------------
# Fused kernel: vocab projection + prevent-repetition + online LSE + online
# unpenalised top-K candidate selection (values emitted as log-probs).
# ---------------------------------------------------------------------------
def _project_lse_topk_kernel(h_ref, w_ref, b_ref, prev_ref,
                             vals_ref, idxs_ref, m_sc, s_sc, *, k):
    v_ix = pl.program_id(1)
    nv = pl.num_programs(1)

    @pl.when(v_ix == 0)
    def _():
        m_sc[...] = jnp.full_like(m_sc, -jnp.inf)
        s_sc[...] = jnp.zeros_like(s_sc)
        vals_ref[...] = jnp.full(vals_ref.shape, -jnp.inf, jnp.float32)
        idxs_ref[...] = jnp.full(idxs_ref.shape, PAD_ID, jnp.int32)

    # MXU vocab projection for this vocab tile.
    x = jnp.dot(h_ref[...], w_ref[...],
                preferred_element_type=jnp.float32) + b_ref[...]
    tr, tv = x.shape
    col = lax.broadcasted_iota(jnp.int32, (tr, tv), 1) + v_ix * tv
    # prevent_repetition: add -1e-16 to the previously emitted token's logit.
    # Kept identical to the original torch module (numerically ~a no-op in f32).
    x = x + jnp.where(col == prev_ref[...], jnp.float32(-1e-16),
                      jnp.float32(0.0))

    # Online (flash-style) log-sum-exp.
    row_max = jnp.max(x, axis=-1, keepdims=True)
    m_prev = m_sc[...]
    m_new = jnp.maximum(m_prev, row_max)
    s_sc[...] = (s_sc[...] * jnp.exp(m_prev - m_new)
                 + jnp.sum(jnp.exp(x - m_new), axis=-1, keepdims=True))
    m_sc[...] = m_new

    # Early-exit gate: skip the top-K work if no row of this tile can improve
    # its running K-th candidate.
    kth = vals_ref[...][:, k - 1:k]
    gate = (v_ix == 0) | jnp.any(row_max > kth)

    @pl.when(gate)
    def _():
        # Tile-local top-K (iterative argmax over this vocab tile).
        loc_v, loc_i = [], []
        xl = x
        for _ in range(k):
            m = jnp.max(xl, axis=-1, keepdims=True)
            sel = jnp.min(jnp.where(xl >= m, col, jnp.int32(2 ** 30)),
                          axis=-1, keepdims=True)
            loc_v.append(m)
            loc_i.append(sel)
            xl = jnp.where(col == sel, -jnp.inf, xl)

        # Merge with the running top-K kept in the (lane-dense) output refs.
        run_v = vals_ref[...][:, :k]
        run_i = idxs_ref[...][:, :k]
        cand_v = jnp.concatenate([run_v] + loc_v, axis=-1)      # (tr, 2k)
        cand_i = jnp.concatenate([run_i] + loc_i, axis=-1)
        pos = lax.broadcasted_iota(jnp.int32, cand_v.shape, 1)

        new_v, new_i = [], []
        cv = cand_v
        for _ in range(k):
            m = jnp.max(cv, axis=-1, keepdims=True)
            sp = jnp.min(jnp.where(cv >= m, pos, jnp.int32(2 ** 30)),
                         axis=-1, keepdims=True)
            new_v.append(m)
            new_i.append(jnp.sum(jnp.where(pos == sp, cand_i, 0),
                                 axis=-1, keepdims=True))
            cv = jnp.where(pos == sp, -jnp.inf, cv)

        pad_v = jnp.full((tr, vals_ref.shape[1] - k), -jnp.inf, jnp.float32)
        pad_i = jnp.full((tr, idxs_ref.shape[1] - k), PAD_ID, jnp.int32)
        vals_ref[...] = jnp.concatenate(new_v + [pad_v], axis=-1)
        idxs_ref[...] = jnp.concatenate(new_i + [pad_i], axis=-1)

    # Convert candidate logits to log-probabilities on the last vocab tile.
    @pl.when(v_ix == nv - 1)
    def _():
        norm = m_sc[...] + jnp.log(s_sc[...])                   # (tr, 1)
        vals_ref[...] = vals_ref[...] - norm                    # -inf pads stay


def fused_project_topk(h_bf16, w_bf16, bias, prev_i32, *, k, tile_v=None):
    """Returns (vals, idxs): lane-dense (R, 128) top-k log-probs / token ids."""
    R, H = h_bf16.shape
    V = w_bf16.shape[1]
    assert k <= LANE
    TR = R                                  # stream the weight matrix once
    TV = _pick_vocab_tile(V, R, H, cap=tile_v)
    need = _fused_vmem_bytes(R, H, TV)
    vmem_limit = int(min(max(need + (8 << 20), 32 << 20), 48 << 20))
    kern = functools.partial(_project_lse_topk_kernel, k=k)
    return pl.pallas_call(
        kern,
        out_shape=(
            jax.ShapeDtypeStruct((R, LANE), jnp.float32),   # candidate log-probs
            jax.ShapeDtypeStruct((R, LANE), jnp.int32),     # candidate token ids
        ),
        grid=(R // TR, V // TV),
        in_specs=[
            pl.BlockSpec((TR, H), lambda r, v: (r, 0)),
            pl.BlockSpec((H, TV), lambda r, v: (0, v)),
            pl.BlockSpec((1, TV), lambda r, v: (0, v)),
            pl.BlockSpec((TR, 1), lambda r, v: (r, 0)),
        ],
        out_specs=(
            pl.BlockSpec((TR, LANE), lambda r, v: (r, 0)),
            pl.BlockSpec((TR, LANE), lambda r, v: (r, 0)),
        ),
        scratch_shapes=[
            pltpu.VMEM((TR, 1), jnp.float32),   # running max
            pltpu.VMEM((TR, 1), jnp.float32),   # running sum of exp
        ],
        compiler_params=pltpu.CompilerParams(
            dimension_semantics=("parallel", "arbitrary"),
            vmem_limit_bytes=vmem_limit),
    )(h_bf16, w_bf16, bias, prev_i32)


# ---------------------------------------------------------------------------
# Synthetic decoder parameters (stand-in for the external `model` argument)
# ---------------------------------------------------------------------------
def make_model(key, vocab_size, hidden):
    k1, k2, k3 = jax.random.split(key, 3)
    emb = jax.random.normal(k1, (vocab_size, hidden), jnp.float32) * 0.5
    w_out = (jax.random.normal(k2, (hidden, vocab_size), jnp.float32)
             * 0.5).astype(jnp.bfloat16)     # bf16 weight stream for the MXU
    b_out = jax.random.normal(k3, (1, vocab_size), jnp.float32) * 0.1
    return {"emb": emb, "w_out": w_out, "b_out": b_out}


# ---------------------------------------------------------------------------
# Diverse beam search (DiverseBeamSearchSampler.forward, BART_HACK=False)
# ---------------------------------------------------------------------------
@functools.partial(
    jax.jit,
    static_argnames=("beam_width", "beam_expansion", "num_groups",
                     "penalty_weight", "length_alpha", "max_out_len",
                     "tile_v"))
def _decode(emb, w_out, b_out, src_enc, *, beam_width, beam_expansion,
            num_groups, penalty_weight, length_alpha, max_out_len, tile_v):
    B, _ = src_enc.shape
    W, E, G = beam_width, beam_expansion, num_groups
    WG = W // G
    R = B * W
    # The penalty can demote at most (G-1)*WG distinct tokens, so the
    # penalised top-E is contained in the unpenalised top-K for this K.
    K = max(W, E + (G - 1) * WG)
    ML1 = max_out_len + 1
    alpha = float(length_alpha)
    pw = float(penalty_weight)

    src_tiled = jnp.repeat(src_enc, W, axis=0)                  # (R, H)

    def run_model(last_tok):                                    # (B, W) int32
        h = jnp.tanh(emb[last_tok.reshape(-1)] + src_tiled)
        vals, idxs = fused_project_topk(
            h.astype(jnp.bfloat16), w_out, b_out,
            last_tok.reshape(R, 1).astype(jnp.int32), k=K, tile_v=tile_v)
        return vals[:, :K].reshape(B, W, K), idxs[:, :K].reshape(B, W, K)

    out_seq = jnp.full((B, W, ML1), PAD_ID, jnp.int32).at[:, :, 0].set(BOS_ID)

    # ---- step 0: expand beam 0's distribution into the W beams ------------
    last0 = out_seq[:, :, 0]
    lp0, id0 = run_model(last0)
    tok0 = id0[:, 0, :W]                                        # (B, W)
    val0 = lp0[:, 0, :W]
    out_seq = out_seq.at[:, :, 1].set(tok0)
    cum0 = val0                                                 # cumulative logp
    len0 = (tok0 != PAD_ID).astype(jnp.int32) + jnp.int32(1)    # incl. BOS
    done0 = (last0 == PAD_ID) | (last0 == EOS_ID)               # all False

    kcol = jnp.arange(K)[None, None, :]

    def cond_fn(state):
        t, _, _, _, done = state
        return (jnp.sum(done) < B * W) & (t < max_out_len)

    def body_fn(state):
        t, out_seq, cum, hyp_len, _ = state
        last = lax.dynamic_index_in_dim(out_seq, t, axis=2, keepdims=False)
        done = (last == PAD_ID) | (last == EOS_ID)              # (B, W)
        lp, ids = run_model(last)                               # (B, W, K)

        sel_tok_g, sel_seq_g, sel_cum_g, sel_plen_g = [], [], [], []
        for gix in range(G):
            gs = gix * WG
            g_lp = lp[:, gs:gs + WG]                            # (B, WG, K)
            g_id = ids[:, gs:gs + WG]
            g_done = done[:, gs:gs + WG]

            if gix > 0:
                # Diversity penalty from tokens already chosen by earlier
                # groups this step (tiny candidate set, plain JAX).
                used = jnp.concatenate(sel_tok_g, axis=1)       # (B, gix*WG)
                hit = ((g_id[..., None] == used[:, None, None, :])
                       & (used[:, None, None, :] != PAD_ID))
                g_lp = g_lp - jnp.sum(hit, axis=-1).astype(jnp.float32) * pw

            # Done beams: only PAD (log-prob 0) stays selectable.
            g_lp = jnp.where(g_done[..., None],
                             jnp.where(kcol == 0, jnp.float32(0.0), -jnp.inf),
                             g_lp)
            g_id = jnp.where(g_done[..., None], PAD_ID, g_id)

            # Penalised top-E per parent beam over the K candidates.
            v_e, p_e = lax.top_k(g_lp, E)                       # (B, WG, E)
            i_e = jnp.take_along_axis(g_id, p_e, axis=-1)

            p_cum = cum[:, gs:gs + WG]                          # (B, WG)
            p_len = hyp_len[:, gs:gs + WG]
            exp_cum = (p_cum[..., None] + v_e).reshape(B, WG * E)
            exp_len = (p_len[..., None]
                       + (i_e != PAD_ID).astype(jnp.int32)).reshape(B, WG * E)
            length_pen = (jnp.power((5.0 + exp_len).astype(jnp.float32),
                                    alpha) / (6.0 ** alpha))
            beam_sc = exp_cum / length_pen
            _, top = lax.top_k(beam_sc, WG)                     # (B, WG)
            parent = top // E

            sel_tok = jnp.take_along_axis(i_e.reshape(B, WG * E), top, axis=1)
            sel_cum = jnp.take_along_axis(exp_cum, top, axis=1)
            sel_plen = jnp.take_along_axis(p_len, parent, axis=1)
            pg = parent + gs                                    # global beam row
            sel_seq = jnp.take_along_axis(
                out_seq, jnp.broadcast_to(pg[:, :, None], (B, WG, ML1)), axis=1)

            sel_tok_g.append(sel_tok)
            sel_seq_g.append(sel_seq)
            sel_cum_g.append(sel_cum)
            sel_plen_g.append(sel_plen)

        new_seq = jnp.concatenate(sel_seq_g, axis=1)            # (B, W, ML1)
        sel_tok = jnp.concatenate(sel_tok_g, axis=1)            # (B, W)
        new_cum = jnp.concatenate(sel_cum_g, axis=1)
        p_len_all = jnp.concatenate(sel_plen_g, axis=1)

        prev_tok = lax.dynamic_index_in_dim(new_seq, t, axis=2, keepdims=False)
        done_end = (prev_tok == EOS_ID) | (prev_tok == PAD_ID)
        final_tok = jnp.where(done_end, PAD_ID, sel_tok)
        new_seq = lax.dynamic_update_slice_in_dim(
            new_seq, final_tok[:, :, None], t + 1, axis=2)
        new_len = p_len_all + (final_tok != PAD_ID).astype(jnp.int32)
        return (t + 1, new_seq, new_cum, new_len, done_end)

    _, out_seq, cum, _, _ = lax.while_loop(
        cond_fn, body_fn, (jnp.int32(1), out_seq, cum0, len0, done0))

    # Finalisation (matches the torch epilogue; output_len is NOT re-ordered).
    output_len = jnp.sum(out_seq != PAD_ID, axis=-1)
    length_pen = jnp.power((5.0 + output_len).astype(jnp.float32),
                           alpha) / (6.0 ** alpha)
    beam_scores = cum / length_pen
    order = jnp.argsort(-beam_scores, axis=-1)
    sorted_scores = jnp.take_along_axis(beam_scores, order, axis=-1)
    out_seq = jnp.take_along_axis(
        out_seq, jnp.broadcast_to(order[:, :, None], out_seq.shape), axis=1)
    return out_seq, sorted_scores, output_len


def diverse_beam_search(model_params, batch, config):
    assert config["beam_width"] % config["num_groups"] == 0, \
        "Beam width for DBS must be divisible by num groups!"
    assert config["max_out_len"] >= 1
    out_seq, sorted_scores, output_len = _decode(
        model_params["emb"], model_params["w_out"], model_params["b_out"],
        batch["src_enc"],
        beam_width=int(config["beam_width"]),
        beam_expansion=int(config["beam_expansion"]),
        num_groups=int(config["num_groups"]),
        penalty_weight=float(config["penalty_weight"]),
        length_alpha=float(config["length_alpha"]),
        max_out_len=int(config["max_out_len"]),
        tile_v=(int(config["tile_v"]) if config.get("tile_v") else None),
    )
    return out_seq, sorted_scores, output_len, {}


# ---------------------------------------------------------------------------
if __name__ == "__main__":
    key = jax.random.PRNGKey(0)
    B, HIDDEN, V = 2, 128, 1024
    config = dict(
        vocab_size=V,
        beam_width=4,
        beam_expansion=2,
        num_groups=2,
        penalty_weight=0.5,
        length_alpha=1.0,
        max_out_len=8,
        tile_v=256,          # cap -> 4 vocab tiles: exercises online LSE/top-K merge
    )
    kb, km = jax.random.split(key)
    batch = {"src_enc": jax.random.normal(kb, (B, HIDDEN), jnp.float32)}
    params = make_model(km, V, HIDDEN)

    out_seq, sorted_scores, out_len, _ = diverse_beam_search(
        params, batch, config)
    jax.block_until_ready((out_seq, sorted_scores, out_len))
    print("KERNEL_OK")
</pallas_src>

<mosaic_0001>
module attributes {stable_mosaic.version = 11 : i64} {
  func.func @_project_lse_topk_kernel(%arg0: i32, %arg1: i32, %arg2: memref<8x128xbf16, #tpu.memory_space<vmem>>, %arg3: memref<128x256xbf16, #tpu.memory_space<vmem>>, %arg4: memref<1x256xf32, #tpu.memory_space<vmem>>, %arg5: memref<8x1xi32, #tpu.memory_space<vmem>>, %arg6: memref<8x128xf32, #tpu.memory_space<vmem>>, %arg7: memref<8x128xi32, #tpu.memory_space<vmem>>, %arg8: memref<8x1xf32, #tpu.memory_space<vmem>>, %arg9: memref<8x1xf32, #tpu.memory_space<vmem>>) attributes {dimension_semantics = [#tpu.dimension_semantics<parallel>, #tpu.dimension_semantics<arbitrary>], iteration_bounds = array<i64: 1, 4>, scalar_prefetch = 0 : i64, scratch_operands = 2 : i64, tpu.core_type = #tpu.core_type<tc>, window_params = [{transform_indices = @transform_0, window_bounds = array<i64: 8, 128>}, {transform_indices = @transform_1, window_bounds = array<i64: 128, 256>}, {transform_indices = @transform_2, window_bounds = array<i64: 1, 256>}, {transform_indices = @transform_3, window_bounds = array<i64: 8, 1>}, {transform_indices = @transform_4, window_bounds = array<i64: 8, 128>}, {transform_indices = @transform_5, window_bounds = array<i64: 8, 128>}]} {
    %c0_i32 = arith.constant 0 : i32
    %0 = arith.cmpi eq, %arg1, %c0_i32 : i32
    %1 = arith.extui %0 : i1 to i32
    %c0_i32_0 = arith.constant 0 : i32
    %2 = arith.cmpi ne, %1, %c0_i32_0 : i32
    scf.if %2 {
      %cst_29 = arith.constant 0xFF800000 : f32
      %54 = vector.broadcast %cst_29 : f32 to vector<8x1xf32>
      %c0_30 = arith.constant 0 : index
      %c0_31 = arith.constant 0 : index
      %55 = vector.load %arg8[%c0_30, %c0_31] : memref<8x1xf32, #tpu.memory_space<vmem>>, vector<8x1xf32>
      tpu.vector_store %arg8[%c0_30, %c0_31], %54 {strides = array<i32>} : memref<8x1xf32, #tpu.memory_space<vmem>>, vector<8x1xf32>,
      %cst_32 = arith.constant 0.000000e+00 : f32
      %56 = vector.broadcast %cst_32 : f32 to vector<8x1xf32>
      %c0_33 = arith.constant 0 : index
      %c0_34 = arith.constant 0 : index
      %57 = vector.load %arg9[%c0_33, %c0_34] : memref<8x1xf32, #tpu.memory_space<vmem>>, vector<8x1xf32>
      tpu.vector_store %arg9[%c0_33, %c0_34], %56 {strides = array<i32>} : memref<8x1xf32, #tpu.memory_space<vmem>>, vector<8x1xf32>,
      %cst_35 = arith.constant 0xFF800000 : f32
      %58 = vector.broadcast %cst_35 : f32 to vector<8x128xf32>
      %c0_36 = arith.constant 0 : index
      %c0_37 = arith.constant 0 : index
      %59 = vector.load %arg6[%c0_36, %c0_37] : memref<8x128xf32, #tpu.memory_space<vmem>>, vector<8x128xf32>
      tpu.vector_store %arg6[%c0_36, %c0_37], %58 {strides = array<i32>} : memref<8x128xf32, #tpu.memory_space<vmem>>, vector<8x128xf32>,
      %c0_i32_38 = arith.constant 0 : i32
      %60 = vector.broadcast %c0_i32_38 : i32 to vector<8x128xi32>
      %c0_39 = arith.constant 0 : index
      %c0_40 = arith.constant 0 : index
      %61 = vector.load %arg7[%c0_39, %c0_40] : memref<8x128xi32, #tpu.memory_space<vmem>>, vector<8x128xi32>
      tpu.vector_store %arg7[%c0_39, %c0_40], %60 {strides = array<i32>} : memref<8x128xi32, #tpu.memory_space<vmem>>, vector<8x128xi32>,
    } else {
    }
    %c0 = arith.constant 0 : index
    %c0_1 = arith.constant 0 : index
    %3 = vector.load %arg2[%c0, %c0_1] : memref<8x128xbf16, #tpu.memory_space<vmem>>, vector<8x128xbf16>
    %c0_2 = arith.constant 0 : index
    %c0_3 = arith.constant 0 : index
    %4 = vector.load %arg3[%c0_2, %c0_3] : memref<128x256xbf16, #tpu.memory_space<vmem>>, vector<128x256xbf16>
    %cst = arith.constant dense<0.000000e+00> : vector<8x256xf32>
    %5 = tpu.matmul %3, %4, %cst {dimension_numbers = #tpu.dot_dimension_numbers<[1], [0], [0], [1], [0, 0, 1, 1], [], []>} : vector<8x128xbf16>, vector<128x256xbf16>, vector<8x256xf32> -> vector<8x256xf32>
    %c0_4 = arith.constant 0 : index
    %c0_5 = arith.constant 0 : index
    %6 = vector.load %arg4[%c0_4, %c0_5] : memref<1x256xf32, #tpu.memory_space<vmem>>, vector<1x256xf32>
    %7 = vector.broadcast %6 : vector<1x256xf32> to vector<8x256xf32>
    %8 = arith.addf %5, %7 : vector<8x256xf32>
    %9 = tpu.iota {dimensions = array<i32: 1>} : vector<8x256xi32>
    %c256_i32 = arith.constant 256 : i32
    %10 = arith.muli %arg1, %c256_i32 : i32
    %11 = vector.broadcast %10 : i32 to vector<8x256xi32>
    %12 = arith.addi %9, %11 : vector<8x256xi32>
    %c0_6 = arith.constant 0 : index
    %c0_7 = arith.constant 0 : index
    %13 = vector.load %arg5[%c0_6, %c0_7] : memref<8x1xi32, #tpu.memory_space<vmem>>, vector<8x1xi32>
    %14 = vector.broadcast %13 : vector<8x1xi32> to vector<8x256xi32>
    %15 = arith.cmpi eq, %12, %14 : vector<8x256xi32>
    %cst_8 = arith.constant -1.000000e-16 : f32
    %cst_9 = arith.constant 0.000000e+00 : f32
    %16 = vector.broadcast %cst_8 : f32 to vector<8x256xf32>
    %17 = vector.broadcast %cst_9 : f32 to vector<8x256xf32>
    %18 = arith.select %15, %16, %17 : vector<8x256xi1>, vector<8x256xf32>
    %19 = arith.addf %8, %18 : vector<8x256xf32>
    %cst_10 = arith.constant dense<0xFF800000> : vector<8xf32>
    %20 = vector.multi_reduction <maximumf>, %19, %cst_10 [1] : vector<8x256xf32> to vector<8xf32>
    %21 = vector.shape_cast %20 : vector<8xf32> to vector<8x1xf32>
    %c0_11 = arith.constant 0 : index
    %c0_12 = arith.constant 0 : index
    %22 = vector.load %arg8[%c0_11, %c0_12] : memref<8x1xf32, #tpu.memory_space<vmem>>, vector<8x1xf32>
    %23 = arith.maximumf %22, %21 : vector<8x1xf32>
    %c0_13 = arith.constant 0 : index
    %c0_14 = arith.constant 0 : index
    %24 = vector.load %arg9[%c0_13, %c0_14] : memref<8x1xf32, #tpu.memory_space<vmem>>, vector<8x1xf32>
    %25 = arith.subf %22, %23 : vector<8x1xf32>
    %26 = math.exp %25 : vector<8x1xf32>
    %27 = arith.mulf %24, %26 : vector<8x1xf32>
    %28 = vector.broadcast %23 : vector<8x1xf32> to vector<8x256xf32>
    %29 = arith.subf %19, %28 : vector<8x256xf32>
    %30 = math.exp %29 : vector<8x256xf32>
    %cst_15 = arith.constant dense<0.000000e+00> : vector<8xf32>
    %31 = vector.multi_reduction <add>, %30, %cst_15 [1] : vector<8x256xf32> to vector<8xf32>
    %32 = vector.shape_cast %31 : vector<8xf32> to vector<8x1xf32>
    %33 = arith.addf %27, %32 : vector<8x1xf32>
    %c0_16 = arith.constant 0 : index
    %c0_17 = arith.constant 0 : index
    %34 = vector.load %arg9[%c0_16, %c0_17] : memref<8x1xf32, #tpu.memory_space<vmem>>, vector<8x1xf32>
    tpu.vector_store %arg9[%c0_16, %c0_17], %33 {strides = array<i32>} : memref<8x1xf32, #tpu.memory_space<vmem>>, vector<8x1xf32>,
    %c0_18 = arith.constant 0 : index
    %c0_19 = arith.constant 0 : index
    %35 = vector.load %arg8[%c0_18, %c0_19] : memref<8x1xf32, #tpu.memory_space<vmem>>, vector<8x1xf32>
    tpu.vector_store %arg8[%c0_18, %c0_19], %23 {strides = array<i32>} : memref<8x1xf32, #tpu.memory_space<vmem>>, vector<8x1xf32>,
    %c0_20 = arith.constant 0 : index
    %c0_21 = arith.constant 0 : index
    %36 = vector.load %arg6[%c0_20, %c0_21] : memref<8x128xf32, #tpu.memory_space<vmem>>, vector<8x128xf32>
    %37 = vector.extract_strided_slice %36 {offsets = [0, 3], sizes = [8, 1], strides = [1, 1]} : vector<8x128xf32> to vector<8x1xf32>
    %c0_i32_22 = arith.constant 0 : i32
    %38 = arith.cmpi eq, %arg1, %c0_i32_22 : i32
    %39 = arith.cmpf ogt, %21, %37 : vector<8x1xf32>
    %cst_23 = arith.constant 1.000000e+00 : f32
    %cst_24 = arith.constant 0.000000e+00 : f32
    %40 = vector.broadcast %cst_23 : f32 to vector<8x1xf32>
    %41 = vector.broadcast %cst_24 : f32 to vector<8x1xf32>
    %42 = arith.select %39, %40, %41 : vector<8x1xi1>, vector<8x1xf32>
    %43 = vector.shape_cast %42 : vector<8x1xf32> to vector<1x8x1xf32>
    %cst_25 = arith.constant dense<0xFF800000> : vector<1xf32>
    %44 = vector.multi_reduction <maximumf>, %43, %cst_25 [1, 2] : vector<1x8x1xf32> to vector<1xf32>
    %45 = vector.shape_cast %44 : vector<1xf32> to vector<1x1x1xf32>
    %46 = vector.extract %45[0, 0, 0] : f32 from vector<1x1x1xf32>
    %cst_26 = arith.constant 0.000000e+00 : f32
    %47 = arith.cmpf ogt, %46, %cst_26 : f32
    %48 = arith.ori %38, %47 : i1
    %49 = arith.extui %48 : i1 to i32
    %c0_i32_27 = arith.constant 0 : i32
    %50 = arith.cmpi ne, %49, %c0_i32_27 : i32
    scf.if %50 {
      %cst_29 = arith.constant dense<0xFF800000> : vector<8xf32>
      %54 = vector.multi_reduction <maximumf>, %19, %cst_29 [1] : vector<8x256xf32> to vector<8xf32>
      %55 = vector.shape_cast %54 : vector<8xf32> to vector<8x1xf32>
      %56 = vector.broadcast %55 : vector<8x1xf32> to vector<8x256xf32>
      %57 = arith.cmpf oge, %19, %56 : vector<8x256xf32>
      %c1073741824_i32 = arith.constant 1073741824 : i32
      %58 = vector.broadcast %c1073741824_i32 : i32 to vector<8x256xi32>
      %59 = arith.select %57, %12, %58 : vector<8x256xi1>, vector<8x256xi32>
      %cst_30 = arith.constant dense<2147483647> : vector<8xi32>
      %60 = vector.multi_reduction <minsi>, %59, %cst_30 [1] : vector<8x256xi32> to vector<8xi32>
      %61 = vector.shape_cast %60 : vector<8xi32> to vector<8x1xi32>
      %62 = vector.broadcast %61 : vector<8x1xi32> to vector<8x256xi32>
      %63 = arith.cmpi eq, %12, %62 : vector<8x256xi32>
      %cst_31 = arith.constant 0xFF800000 : f32
      %64 = vector.broadcast %cst_31 : f32 to vector<8x256xf32>
      %65 = arith.select %63, %64, %19 : vector<8x256xi1>, vector<8x256xf32>
      %cst_32 = arith.constant dense<0xFF800000> : vector<8xf32>
      %66 = vector.multi_reduction <maximumf>, %65, %cst_32 [1] : vector<8x256xf32> to vector<8xf32>
      %67 = vector.shape_cast %66 : vector<8xf32> to vector<8x1xf32>
      %68 = vector.broadcast %67 : vector<8x1xf32> to vector<8x256xf32>
      %69 = arith.cmpf oge, %65, %68 : vector<8x256xf32>
      %c1073741824_i32_33 = arith.constant 1073741824 : i32
      %70 = vector.broadcast %c1073741824_i32_33 : i32 to vector<8x256xi32>
      %71 = arith.select %69, %12, %70 : vector<8x256xi1>, vector<8x256xi32>
      %cst_34 = arith.constant dense<2147483647> : vector<8xi32>
      %72 = vector.multi_reduction <minsi>, %71, %cst_34 [1] : vector<8x256xi32> to vector<8xi32>
      %73 = vector.shape_cast %72 : vector<8xi32> to vector<8x1xi32>
      %74 = vector.broadcast %73 : vector<8x1xi32> to vector<8x256xi32>
      %75 = arith.cmpi eq, %12, %74 : vector<8x256xi32>
      %cst_35 = arith.constant 0xFF800000 : f32
      %76 = vector.broadcast %cst_35 : f32 to vector<8x256xf32>
      %77 = arith.select %75, %76, %65 : vector<8x256xi1>, vector<8x256xf32>
      %cst_36 = arith.constant dense<0xFF800000> : vector<8xf32>
      %78 = vector.multi_reduction <maximumf>, %77, %cst_36 [1] : vector<8x256xf32> to vector<8xf32>
      %79 = vector.shape_cast %78 : vector<8xf32> to vector<8x1xf32>
      %80 = vector.broadcast %79 : vector<8x1xf32> to vector<8x256xf32>
      %81 = arith.cmpf oge, %77, %80 : vector<8x256xf32>
      %c1073741824_i32_37 = arith.constant 1073741824 : i32
      %82 = vector.broadcast %c1073741824_i32_37 : i32 to vector<8x256xi32>
      %83 = arith.select %81, %12, %82 : vector<8x256xi1>, vector<8x256xi32>
      %cst_38 = arith.constant dense<2147483647> : vector<8xi32>
      %84 = vector.multi_reduction <minsi>, %83, %cst_38 [1] : vector<8x256xi32> to vector<8xi32>
      %85 = vector.shape_cast %84 : vector<8xi32> to vector<8x1xi32>
      %86 = vector.broadcast %85 : vector<8x1xi32> to vector<8x256xi32>
      %87 = arith.cmpi eq, %12, %86 : vector<8x256xi32>
      %cst_39 = arith.constant 0xFF800000 : f32
      %88 = vector.broadcast %cst_39 : f32 to vector<8x256xf32>
      %89 = arith.select %87, %88, %77 : vector<8x256xi1>, vector<8x256xf32>
      %cst_40 = arith.constant dense<0xFF800000> : vector<8xf32>
      %90 = vector.multi_reduction <maximumf>, %89, %cst_40 [1] : vector<8x256xf32> to vector<8xf32>
      %91 = vector.shape_cast %90 : vector<8xf32> to vector<8x1xf32>
      %92 = vector.broadcast %91 : vector<8x1xf32> to vector<8x256xf32>
      %93 = arith.cmpf oge, %89, %92 : vector<8x256xf32>
      %c1073741824_i32_41 = arith.constant 1073741824 : i32
      %94 = vector.broadcast %c1073741824_i32_41 : i32 to vector<8x256xi32>
      %95 = arith.select %93, %12, %94 : vector<8x256xi1>, vector<8x256xi32>
      %cst_42 = arith.constant dense<2147483647> : vector<8xi32>
      %96 = vector.multi_reduction <minsi>, %95, %cst_42 [1] : vector<8x256xi32> to vector<8xi32>
      %97 = vector.shape_cast %96 : vector<8xi32> to vector<8x1xi32>
      %c0_43 = arith.constant 0 : index
      %c0_44 = arith.constant 0 : index
      %98 = vector.load %arg6[%c0_43, %c0_44] : memref<8x128xf32, #tpu.memory_space<vmem>>, vector<8x128xf32>
      %99 = vector.extract_strided_slice %98 {offsets = [0, 0], sizes = [8, 4], strides = [1, 1]} : vector<8x128xf32> to vector<8x4xf32>
      %c0_45 = arith.constant 0 : index
      %c0_46 = arith.constant 0 : index
      %100 = vector.load %arg7[%c0_45, %c0_46] : memref<8x128xi32, #tpu.memory_space<vmem>>, vector<8x128xi32>
      %101 = vector.extract_strided_slice %100 {offsets = [0, 0], sizes = [8, 4], strides = [1, 1]} : vector<8x128xi32> to vector<8x4xi32>
      %102 = tpu.concatenate %99, %55, %67, %79, %91 in 1 : vector<8x4xf32>, vector<8x1xf32>, vector<8x1xf32>, vector<8x1xf32>, vector<8x1xf32> -> vector<8x8xf32>
      %103 = tpu.concatenate %101, %61, %73, %85, %97 in 1 : vector<8x4xi32>, vector<8x1xi32>, vector<8x1xi32>, vector<8x1xi32>, vector<8x1xi32> -> vector<8x8xi32>
      %104 = tpu.iota {dimensions = array<i32: 1>} : vector<8x8xi32>
      %cst_47 = arith.constant dense<0xFF800000> : vector<8xf32>
      %105 = vector.multi_reduction <maximumf>, %102, %cst_47 [1] : vector<8x8xf32> to vector<8xf32>
      %106 = vector.shape_cast %105 : vector<8xf32> to vector<8x1xf32>
      %107 = vector.broadcast %106 : vector<8x1xf32> to vector<8x8xf32>
      %108 = arith.cmpf oge, %102, %107 : vector<8x8xf32>
      %c1073741824_i32_48 = arith.constant 1073741824 : i32
      %109 = vector.broadcast %c1073741824_i32_48 : i32 to vector<8x8xi32>
      %110 = arith.select %108, %104, %109 : vector<8x8xi1>, vector<8x8xi32>
      %cst_49 = arith.constant dense<2147483647> : vector<8xi32>
      %111 = vector.multi_reduction <minsi>, %110, %cst_49 [1] : vector<8x8xi32> to vector<8xi32>
      %112 = vector.shape_cast %111 : vector<8xi32> to vector<8x1xi32>
      %113 = vector.broadcast %112 : vector<8x1xi32> to vector<8x8xi32>
      %114 = arith.cmpi eq, %104, %113 : vector<8x8xi32>
      %c0_i32_50 = arith.constant 0 : i32
      %115 = vector.broadcast %c0_i32_50 : i32 to vector<8x8xi32>
      %116 = arith.select %114, %103, %115 : vector<8x8xi1>, vector<8x8xi32>
      %cst_51 = arith.constant dense<0> : vector<8xi32>
      %117 = vector.multi_reduction <add>, %116, %cst_51 [1] : vector<8x8xi32> to vector<8xi32>
      %118 = vector.shape_cast %117 : vector<8xi32> to vector<8x1xi32>
      %119 = vector.broadcast %112 : vector<8x1xi32> to vector<8x8xi32>
      %120 = arith.cmpi eq, %104, %119 : vector<8x8xi32>
      %cst_52 = arith.constant 0xFF800000 : f32
      %121 = vector.broadcast %cst_52 : f32 to vector<8x8xf32>
      %122 = arith.select %120, %121, %102 : vector<8x8xi1>, vector<8x8xf32>
      %cst_53 = arith.constant dense<0xFF800000> : vector<8xf32>
      %123 = vector.multi_reduction <maximumf>, %122, %cst_53 [1] : vector<8x8xf32> to vector<8xf32>
      %124 = vector.shape_cast %123 : vector<8xf32> to vector<8x1xf32>
      %125 = vector.broadcast %124 : vector<8x1xf32> to vector<8x8xf32>
      %126 = arith.cmpf oge, %122, %125 : vector<8x8xf32>
      %c1073741824_i32_54 = arith.constant 1073741824 : i32
      %127 = vector.broadcast %c1073741824_i32_54 : i32 to vector<8x8xi32>
      %128 = arith.select %126, %104, %127 : vector<8x8xi1>, vector<8x8xi32>
      %cst_55 = arith.constant dense<2147483647> : vector<8xi32>
      %129 = vector.multi_reduction <minsi>, %128, %cst_55 [1] : vector<8x8xi32> to vector<8xi32>
      %130 = vector.shape_cast %129 : vector<8xi32> to vector<8x1xi32>
      %131 = vector.broadcast %130 : vector<8x1xi32> to vector<8x8xi32>
      %132 = arith.cmpi eq, %104, %131 : vector<8x8xi32>
      %c0_i32_56 = arith.constant 0 : i32
      %133 = vector.broadcast %c0_i32_56 : i32 to vector<8x8xi32>
      %134 = arith.select %132, %103, %133 : vector<8x8xi1>, vector<8x8xi32>
      %cst_57 = arith.constant dense<0> : vector<8xi32>
      %135 = vector.multi_reduction <add>, %134, %cst_57 [1] : vector<8x8xi32> to vector<8xi32>
      %136 = vector.shape_cast %135 : vector<8xi32> to vector<8x1xi32>
      %137 = vector.broadcast %130 : vector<8x1xi32> to vector<8x8xi32>
      %138 = arith.cmpi eq, %104, %137 : vector<8x8xi32>
      %cst_58 = arith.constant 0xFF800000 : f32
      %139 = vector.broadcast %cst_58 : f32 to vector<8x8xf32>
      %140 = arith.select %138, %139, %122 : vector<8x8xi1>, vector<8x8xf32>
      %cst_59 = arith.constant dense<0xFF800000> : vector<8xf32>
      %141 = vector.multi_reduction <maximumf>, %140, %cst_59 [1] : vector<8x8xf32> to vector<8xf32>
      %142 = vector.shape_cast %141 : vector<8xf32> to vector<8x1xf32>
      %143 = vector.broadcast %142 : vector<8x1xf32> to vector<8x8xf32>
      %144 = arith.cmpf oge, %140, %143 : vector<8x8xf32>
      %c1073741824_i32_60 = arith.constant 1073741824 : i32
      %145 = vector.broadcast %c1073741824_i32_60 : i32 to vector<8x8xi32>
      %146 = arith.select %144, %104, %145 : vector<8x8xi1>, vector<8x8xi32>
      %cst_61 = arith.constant dense<2147483647> : vector<8xi32>
      %147 = vector.multi_reduction <minsi>, %146, %cst_61 [1] : vector<8x8xi32> to vector<8xi32>
      %148 = vector.shape_cast %147 : vector<8xi32> to vector<8x1xi32>
      %149 = vector.broadcast %148 : vector<8x1xi32> to vector<8x8xi32>
      %150 = arith.cmpi eq, %104, %149 : vector<8x8xi32>
      %c0_i32_62 = arith.constant 0 : i32
      %151 = vector.broadcast %c0_i32_62 : i32 to vector<8x8xi32>
      %152 = arith.select %150, %103, %151 : vector<8x8xi1>, vector<8x8xi32>
      %cst_63 = arith.constant dense<0> : vector<8xi32>
      %153 = vector.multi_reduction <add>, %152, %cst_63 [1] : vector<8x8xi32> to vector<8xi32>
      %154 = vector.shape_cast %153 : vector<8xi32> to vector<8x1xi32>
      %155 = vector.broadcast %148 : vector<8x1xi32> to vector<8x8xi32>
      %156 = arith.cmpi eq, %104, %155 : vector<8x8xi32>
      %cst_64 = arith.constant 0xFF800000 : f32
      %157 = vector.broadcast %cst_64 : f32 to vector<8x8xf32>
      %158 = arith.select %156, %157, %140 : vector<8x8xi1>, vector<8x8xf32>
      %cst_65 = arith.constant dense<0xFF800000> : vector<8xf32>
      %159 = vector.multi_reduction <maximumf>, %158, %cst_65 [1] : vector<8x8xf32> to vector<8xf32>
      %160 = vector.shape_cast %159 : vector<8xf32> to vector<8x1xf32>
      %161 = vector.broadcast %160 : vector<8x1xf32> to vector<8x8xf32>
      %162 = arith.cmpf oge, %158, %161 : vector<8x8xf32>
      %c1073741824_i32_66 = arith.constant 1073741824 : i32
      %163 = vector.broadcast %c1073741824_i32_66 : i32 to vector<8x8xi32>
      %164 = arith.select %162, %104, %163 : vector<8x8xi1>, vector<8x8xi32>
      %cst_67 = arith.constant dense<2147483647> : vector<8xi32>
      %165 = vector.multi_reduction <minsi>, %164, %cst_67 [1] : vector<8x8xi32> to vector<8xi32>
      %166 = vector.shape_cast %165 : vector<8xi32> to vector<8x1xi32>
      %167 = vector.broadcast %166 : vector<8x1xi32> to vector<8x8xi32>
      %168 = arith.cmpi eq, %104, %167 : vector<8x8xi32>
      %c0_i32_68 = arith.constant 0 : i32
      %169 = vector.broadcast %c0_i32_68 : i32 to vector<8x8xi32>
      %170 = arith.select %168, %103, %169 : vector<8x8xi1>, vector<8x8xi32>
      %cst_69 = arith.constant dense<0> : vector<8xi32>
      %171 = vector.multi_reduction <add>, %170, %cst_69 [1] : vector<8x8xi32> to vector<8xi32>
      %172 = vector.shape_cast %171 : vector<8xi32> to vector<8x1xi32>
      %cst_70 = arith.constant 0xFF800000 : f32
      %173 = vector.broadcast %cst_70 : f32 to vector<8x124xf32>
      %c0_i32_71 = arith.constant 0 : i32
      %174 = vector.broadcast %c0_i32_71 : i32 to vector<8x124xi32>
      %175 = tpu.concatenate %106, %124, %142, %160, %173 in 1 : vector<8x1xf32>, vector<8x1xf32>, vector<8x1xf32>, vector<8x1xf32>, vector<8x124xf32> -> vector<8x128xf32>
      %c0_72 = arith.constant 0 : index
      %c0_73 = arith.constant 0 : index
      %176 = vector.load %arg6[%c0_72, %c0_73] : memref<8x128xf32, #tpu.memory_space<vmem>>, vector<8x128xf32>
      tpu.vector_store %arg6[%c0_72, %c0_73], %175 {strides = array<i32>} : memref<8x128xf32, #tpu.memory_space<vmem>>, vector<8x128xf32>,
      %177 = tpu.concatenate %118, %136, %154, %172, %174 in 1 : vector<8x1xi32>, vector<8x1xi32>, vector<8x1xi32>, vector<8x1xi32>, vector<8x124xi32> -> vector<8x128xi32>
      %c0_74 = arith.constant 0 : index
      %c0_75 = arith.constant 0 : index
      %178 = vector.load %arg7[%c0_74, %c0_75] : memref<8x128xi32, #tpu.memory_space<vmem>>, vector<8x128xi32>
      tpu.vector_store %arg7[%c0_74, %c0_75], %177 {strides = array<i32>} : memref<8x128xi32, #tpu.memory_space<vmem>>, vector<8x128xi32>,
    } else {
    }
    %c3_i32 = arith.constant 3 : i32
    %51 = arith.cmpi eq, %arg1, %c3_i32 : i32
    %52 = arith.extui %51 : i1 to i32
    %c0_i32_28 = arith.constant 0 : i32
    %53 = arith.cmpi ne, %52, %c0_i32_28 : i32
    scf.if %53 {
      %c0_29 = arith.constant 0 : index
      %c0_30 = arith.constant 0 : index
      %54 = vector.load %arg8[%c0_29, %c0_30] : memref<8x1xf32, #tpu.memory_space<vmem>>, vector<8x1xf32>
      %c0_31 = arith.constant 0 : index
      %c0_32 = arith.constant 0 : index
      %55 = vector.load %arg9[%c0_31, %c0_32] : memref<8x1xf32, #tpu.memory_space<vmem>>, vector<8x1xf32>
      %56 = math.log %55 : vector<8x1xf32>
      %57 = arith.addf %54, %56 : vector<8x1xf32>
      %c0_33 = arith.constant 0 : index
      %c0_34 = arith.constant 0 : index
      %58 = vector.load %arg6[%c0_33, %c0_34] : memref<8x128xf32, #tpu.memory_space<vmem>>, vector<8x128xf32>
      %59 = vector.broadcast %57 : vector<8x1xf32> to vector<8x128xf32>
      %60 = arith.subf %58, %59 : vector<8x128xf32>
      %c0_35 = arith.constant 0 : index
      %c0_36 = arith.constant 0 : index
      %61 = vector.load %arg6[%c0_35, %c0_36] : memref<8x128xf32, #tpu.memory_space<vmem>>, vector<8x128xf32>
      tpu.vector_store %arg6[%c0_35, %c0_36], %60 {strides = array<i32>} : memref<8x128xf32, #tpu.memory_space<vmem>>, vector<8x128xf32>,
    } else {
    }
    return
  }
  func.func @transform_0(%arg0: i32, %arg1: i32) -> (i32, i32) {
    %c0_i32 = arith.constant 0 : i32
    %c0_i32_0 = arith.constant 0 : i32
    return %arg0, %c0_i32 : i32, i32
  }
  func.func @transform_1(%arg0: i32, %arg1: i32) -> (i32, i32) {
    %c0_i32 = arith.constant 0 : i32
    %c0_i32_0 = arith.constant 0 : i32
    return %c0_i32, %arg1 : i32, i32
  }
  func.func @transform_2(%arg0: i32, %arg1: i32) -> (i32, i32) {
    %c0_i32 = arith.constant 0 : i32
    %c0_i32_0 = arith.constant 0 : i32
    return %c0_i32, %arg1 : i32, i32
  }
  func.func @transform_3(%arg0: i32, %arg1: i32) -> (i32, i32) {
    %c0_i32 = arith.constant 0 : i32
    %c0_i32_0 = arith.constant 0 : i32
    return %arg0, %c0_i32 : i32, i32
  }
  func.func @transform_4(%arg0: i32, %arg1: i32) -> (i32, i32) {
    %c0_i32 = arith.constant 0 : i32
    %c0_i32_0 = arith.constant 0 : i32
    return %arg0, %c0_i32 : i32, i32
  }
  func.func @transform_5(%arg0: i32, %arg1: i32) -> (i32, i32) {
    %c0_i32 = arith.constant 0 : i32
    %c0_i32_0 = arith.constant 0 : i32
    return %arg0, %c0_i32 : i32, i32
  }
}

module attributes {stable_mosaic.version = 11 : i64} {
  func.func @_project_lse_topk_kernel(%arg0: i32, %arg1: i32, %arg2: memref<8x128xbf16, #tpu.memory_space<vmem>>, %arg3: memref<128x256xbf16, #tpu.memory_space<vmem>>, %arg4: memref<1x256xf32, #tpu.memory_space<vmem>>, %arg5: memref<8x1xi32, #tpu.memory_space<vmem>>, %arg6: memref<8x128xf32, #tpu.memory_space<vmem>>, %arg7: memref<8x128xi32, #tpu.memory_space<vmem>>, %arg8: memref<8x1xf32, #tpu.memory_space<vmem>>, %arg9: memref<8x1xf32, #tpu.memory_space<vmem>>) attributes {dimension_semantics = [#tpu.dimension_semantics<parallel>, #tpu.dimension_semantics<arbitrary>], iteration_bounds = array<i64: 1, 4>, scalar_prefetch = 0 : i64, scratch_operands = 2 : i64, tpu.core_type = #tpu.core_type<tc>, window_params = [{transform_indices = @transform_0, window_bounds = array<i64: 8, 128>}, {transform_indices = @transform_1, window_bounds = array<i64: 128, 256>}, {transform_indices = @transform_2, window_bounds = array<i64: 1, 256>}, {transform_indices = @transform_3, window_bounds = array<i64: 8, 1>}, {transform_indices = @transform_4, window_bounds = array<i64: 8, 128>}, {transform_indices = @transform_5, window_bounds = array<i64: 8, 128>}]} {
    %c0_i32 = arith.constant 0 : i32
    %0 = arith.cmpi eq, %arg1, %c0_i32 : i32
    %1 = arith.extui %0 : i1 to i32
    %c0_i32_0 = arith.constant 0 : i32
    %2 = arith.cmpi ne, %1, %c0_i32_0 : i32
    scf.if %2 {
      %cst_29 = arith.constant 0xFF800000 : f32
      %54 = vector.broadcast %cst_29 : f32 to vector<8x1xf32>
      %c0_30 = arith.constant 0 : index
      %c0_31 = arith.constant 0 : index
      %55 = vector.load %arg8[%c0_30, %c0_31] : memref<8x1xf32, #tpu.memory_space<vmem>>, vector<8x1xf32>
      tpu.vector_store %arg8[%c0_30, %c0_31], %54 {strides = array<i32>} : memref<8x1xf32, #tpu.memory_space<vmem>>, vector<8x1xf32>,
      %cst_32 = arith.constant 0.000000e+00 : f32
      %56 = vector.broadcast %cst_32 : f32 to vector<8x1xf32>
      %c0_33 = arith.constant 0 : index
      %c0_34 = arith.constant 0 : index
      %57 = vector.load %arg9[%c0_33, %c0_34] : memref<8x1xf32, #tpu.memory_space<vmem>>, vector<8x1xf32>
      tpu.vector_store %arg9[%c0_33, %c0_34], %56 {strides = array<i32>} : memref<8x1xf32, #tpu.memory_space<vmem>>, vector<8x1xf32>,
      %cst_35 = arith.constant 0xFF800000 : f32
      %58 = vector.broadcast %cst_35 : f32 to vector<8x128xf32>
      %c0_36 = arith.constant 0 : index
      %c0_37 = arith.constant 0 : index
      %59 = vector.load %arg6[%c0_36, %c0_37] : memref<8x128xf32, #tpu.memory_space<vmem>>, vector<8x128xf32>
      tpu.vector_store %arg6[%c0_36, %c0_37], %58 {strides = array<i32>} : memref<8x128xf32, #tpu.memory_space<vmem>>, vector<8x128xf32>,
      %c0_i32_38 = arith.constant 0 : i32
      %60 = vector.broadcast %c0_i32_38 : i32 to vector<8x128xi32>
      %c0_39 = arith.constant 0 : index
      %c0_40 = arith.constant 0 : index
      %61 = vector.load %arg7[%c0_39, %c0_40] : memref<8x128xi32, #tpu.memory_space<vmem>>, vector<8x128xi32>
      tpu.vector_store %arg7[%c0_39, %c0_40], %60 {strides = array<i32>} : memref<8x128xi32, #tpu.memory_space<vmem>>, vector<8x128xi32>,
    } else {
    }
    %c0 = arith.constant 0 : index
    %c0_1 = arith.constant 0 : index
    %3 = vector.load %arg2[%c0, %c0_1] : memref<8x128xbf16, #tpu.memory_space<vmem>>, vector<8x128xbf16>
    %c0_2 = arith.constant 0 : index
    %c0_3 = arith.constant 0 : index
    %4 = vector.load %arg3[%c0_2, %c0_3] : memref<128x256xbf16, #tpu.memory_space<vmem>>, vector<128x256xbf16>
    %cst = arith.constant dense<0.000000e+00> : vector<8x256xf32>
    %5 = tpu.matmul %3, %4, %cst {dimension_numbers = #tpu.dot_dimension_numbers<[1], [0], [0], [1], [0, 0, 1, 1], [], []>} : vector<8x128xbf16>, vector<128x256xbf16>, vector<8x256xf32> -> vector<8x256xf32>
    %c0_4 = arith.constant 0 : index
    %c0_5 = arith.constant 0 : index
    %6 = vector.load %arg4[%c0_4, %c0_5] : memref<1x256xf32, #tpu.memory_space<vmem>>, vector<1x256xf32>
    %7 = vector.broadcast %6 : vector<1x256xf32> to vector<8x256xf32>
    %8 = arith.addf %5, %7 : vector<8x256xf32>
    %9 = tpu.iota {dimensions = array<i32: 1>} : vector<8x256xi32>
    %c256_i32 = arith.constant 256 : i32
    %10 = arith.muli %arg1, %c256_i32 : i32
    %11 = vector.broadcast %10 : i32 to vector<8x256xi32>
    %12 = arith.addi %9, %11 : vector<8x256xi32>
    %c0_6 = arith.constant 0 : index
    %c0_7 = arith.constant 0 : index
    %13 = vector.load %arg5[%c0_6, %c0_7] : memref<8x1xi32, #tpu.memory_space<vmem>>, vector<8x1xi32>
    %14 = vector.broadcast %13 : vector<8x1xi32> to vector<8x256xi32>
    %15 = arith.cmpi eq, %12, %14 : vector<8x256xi32>
    %cst_8 = arith.constant -1.000000e-16 : f32
    %cst_9 = arith.constant 0.000000e+00 : f32
    %16 = vector.broadcast %cst_8 : f32 to vector<8x256xf32>
    %17 = vector.broadcast %cst_9 : f32 to vector<8x256xf32>
    %18 = arith.select %15, %16, %17 : vector<8x256xi1>, vector<8x256xf32>
    %19 = arith.addf %8, %18 : vector<8x256xf32>
    %cst_10 = arith.constant dense<0xFF800000> : vector<8xf32>
    %20 = vector.multi_reduction <maximumf>, %19, %cst_10 [1] : vector<8x256xf32> to vector<8xf32>
    %21 = vector.shape_cast %20 : vector<8xf32> to vector<8x1xf32>
    %c0_11 = arith.constant 0 : index
    %c0_12 = arith.constant 0 : index
    %22 = vector.load %arg8[%c0_11, %c0_12] : memref<8x1xf32, #tpu.memory_space<vmem>>, vector<8x1xf32>
    %23 = arith.maximumf %22, %21 : vector<8x1xf32>
    %c0_13 = arith.constant 0 : index
    %c0_14 = arith.constant 0 : index
    %24 = vector.load %arg9[%c0_13, %c0_14] : memref<8x1xf32, #tpu.memory_space<vmem>>, vector<8x1xf32>
    %25 = arith.subf %22, %23 : vector<8x1xf32>
    %26 = math.exp %25 : vector<8x1xf32>
    %27 = arith.mulf %24, %26 : vector<8x1xf32>
    %28 = vector.broadcast %23 : vector<8x1xf32> to vector<8x256xf32>
    %29 = arith.subf %19, %28 : vector<8x256xf32>
    %30 = math.exp %29 : vector<8x256xf32>
    %cst_15 = arith.constant dense<0.000000e+00> : vector<8xf32>
    %31 = vector.multi_reduction <add>, %30, %cst_15 [1] : vector<8x256xf32> to vector<8xf32>
    %32 = vector.shape_cast %31 : vector<8xf32> to vector<8x1xf32>
    %33 = arith.addf %27, %32 : vector<8x1xf32>
    %c0_16 = arith.constant 0 : index
    %c0_17 = arith.constant 0 : index
    %34 = vector.load %arg9[%c0_16, %c0_17] : memref<8x1xf32, #tpu.memory_space<vmem>>, vector<8x1xf32>
    tpu.vector_store %arg9[%c0_16, %c0_17], %33 {strides = array<i32>} : memref<8x1xf32, #tpu.memory_space<vmem>>, vector<8x1xf32>,
    %c0_18 = arith.constant 0 : index
    %c0_19 = arith.constant 0 : index
    %35 = vector.load %arg8[%c0_18, %c0_19] : memref<8x1xf32, #tpu.memory_space<vmem>>, vector<8x1xf32>
    tpu.vector_store %arg8[%c0_18, %c0_19], %23 {strides = array<i32>} : memref<8x1xf32, #tpu.memory_space<vmem>>, vector<8x1xf32>,
    %c0_20 = arith.constant 0 : index
    %c0_21 = arith.constant 0 : index
    %36 = vector.load %arg6[%c0_20, %c0_21] : memref<8x128xf32, #tpu.memory_space<vmem>>, vector<8x128xf32>
    %37 = vector.extract_strided_slice %36 {offsets = [0, 3], sizes = [8, 1], strides = [1, 1]} : vector<8x128xf32> to vector<8x1xf32>
    %c0_i32_22 = arith.constant 0 : i32
    %38 = arith.cmpi eq, %arg1, %c0_i32_22 : i32
    %39 = arith.cmpf ogt, %21, %37 : vector<8x1xf32>
    %cst_23 = arith.constant 1.000000e+00 : f32
    %cst_24 = arith.constant 0.000000e+00 : f32
    %40 = vector.broadcast %cst_23 : f32 to vector<8x1xf32>
    %41 = vector.broadcast %cst_24 : f32 to vector<8x1xf32>
    %42 = arith.select %39, %40, %41 : vector<8x1xi1>, vector<8x1xf32>
    %43 = vector.shape_cast %42 : vector<8x1xf32> to vector<1x8x1xf32>
    %cst_25 = arith.constant dense<0xFF800000> : vector<1xf32>
    %44 = vector.multi_reduction <maximumf>, %43, %cst_25 [1, 2] : vector<1x8x1xf32> to vector<1xf32>
    %45 = vector.shape_cast %44 : vector<1xf32> to vector<1x1x1xf32>
    %46 = vector.extract %45[0, 0, 0] : f32 from vector<1x1x1xf32>
    %cst_26 = arith.constant 0.000000e+00 : f32
    %47 = arith.cmpf ogt, %46, %cst_26 : f32
    %48 = arith.ori %38, %47 : i1
    %49 = arith.extui %48 : i1 to i32
    %c0_i32_27 = arith.constant 0 : i32
    %50 = arith.cmpi ne, %49, %c0_i32_27 : i32
    scf.if %50 {
      %cst_29 = arith.constant dense<0xFF800000> : vector<8xf32>
      %54 = vector.multi_reduction <maximumf>, %19, %cst_29 [1] : vector<8x256xf32> to vector<8xf32>
      %55 = vector.shape_cast %54 : vector<8xf32> to vector<8x1xf32>
      %56 = vector.broadcast %55 : vector<8x1xf32> to vector<8x256xf32>
      %57 = arith.cmpf oge, %19, %56 : vector<8x256xf32>
      %c1073741824_i32 = arith.constant 1073741824 : i32
      %58 = vector.broadcast %c1073741824_i32 : i32 to vector<8x256xi32>
      %59 = arith.select %57, %12, %58 : vector<8x256xi1>, vector<8x256xi32>
      %cst_30 = arith.constant dense<2147483647> : vector<8xi32>
      %60 = vector.multi_reduction <minsi>, %59, %cst_30 [1] : vector<8x256xi32> to vector<8xi32>
      %61 = vector.shape_cast %60 : vector<8xi32> to vector<8x1xi32>
      %62 = vector.broadcast %61 : vector<8x1xi32> to vector<8x256xi32>
      %63 = arith.cmpi eq, %12, %62 : vector<8x256xi32>
      %cst_31 = arith.constant 0xFF800000 : f32
      %64 = vector.broadcast %cst_31 : f32 to vector<8x256xf32>
      %65 = arith.select %63, %64, %19 : vector<8x256xi1>, vector<8x256xf32>
      %cst_32 = arith.constant dense<0xFF800000> : vector<8xf32>
      %66 = vector.multi_reduction <maximumf>, %65, %cst_32 [1] : vector<8x256xf32> to vector<8xf32>
      %67 = vector.shape_cast %66 : vector<8xf32> to vector<8x1xf32>
      %68 = vector.broadcast %67 : vector<8x1xf32> to vector<8x256xf32>
      %69 = arith.cmpf oge, %65, %68 : vector<8x256xf32>
      %c1073741824_i32_33 = arith.constant 1073741824 : i32
      %70 = vector.broadcast %c1073741824_i32_33 : i32 to vector<8x256xi32>
      %71 = arith.select %69, %12, %70 : vector<8x256xi1>, vector<8x256xi32>
      %cst_34 = arith.constant dense<2147483647> : vector<8xi32>
      %72 = vector.multi_reduction <minsi>, %71, %cst_34 [1] : vector<8x256xi32> to vector<8xi32>
      %73 = vector.shape_cast %72 : vector<8xi32> to vector<8x1xi32>
      %74 = vector.broadcast %73 : vector<8x1xi32> to vector<8x256xi32>
      %75 = arith.cmpi eq, %12, %74 : vector<8x256xi32>
      %cst_35 = arith.constant 0xFF800000 : f32
      %76 = vector.broadcast %cst_35 : f32 to vector<8x256xf32>
      %77 = arith.select %75, %76, %65 : vector<8x256xi1>, vector<8x256xf32>
      %cst_36 = arith.constant dense<0xFF800000> : vector<8xf32>
      %78 = vector.multi_reduction <maximumf>, %77, %cst_36 [1] : vector<8x256xf32> to vector<8xf32>
      %79 = vector.shape_cast %78 : vector<8xf32> to vector<8x1xf32>
      %80 = vector.broadcast %79 : vector<8x1xf32> to vector<8x256xf32>
      %81 = arith.cmpf oge, %77, %80 : vector<8x256xf32>
      %c1073741824_i32_37 = arith.constant 1073741824 : i32
      %82 = vector.broadcast %c1073741824_i32_37 : i32 to vector<8x256xi32>
      %83 = arith.select %81, %12, %82 : vector<8x256xi1>, vector<8x256xi32>
      %cst_38 = arith.constant dense<2147483647> : vector<8xi32>
      %84 = vector.multi_reduction <minsi>, %83, %cst_38 [1] : vector<8x256xi32> to vector<8xi32>
      %85 = vector.shape_cast %84 : vector<8xi32> to vector<8x1xi32>
      %86 = vector.broadcast %85 : vector<8x1xi32> to vector<8x256xi32>
      %87 = arith.cmpi eq, %12, %86 : vector<8x256xi32>
      %cst_39 = arith.constant 0xFF800000 : f32
      %88 = vector.broadcast %cst_39 : f32 to vector<8x256xf32>
      %89 = arith.select %87, %88, %77 : vector<8x256xi1>, vector<8x256xf32>
      %cst_40 = arith.constant dense<0xFF800000> : vector<8xf32>
      %90 = vector.multi_reduction <maximumf>, %89, %cst_40 [1] : vector<8x256xf32> to vector<8xf32>
      %91 = vector.shape_cast %90 : vector<8xf32> to vector<8x1xf32>
      %92 = vector.broadcast %91 : vector<8x1xf32> to vector<8x256xf32>
      %93 = arith.cmpf oge, %89, %92 : vector<8x256xf32>
      %c1073741824_i32_41 = arith.constant 1073741824 : i32
      %94 = vector.broadcast %c1073741824_i32_41 : i32 to vector<8x256xi32>
      %95 = arith.select %93, %12, %94 : vector<8x256xi1>, vector<8x256xi32>
      %cst_42 = arith.constant dense<2147483647> : vector<8xi32>
      %96 = vector.multi_reduction <minsi>, %95, %cst_42 [1] : vector<8x256xi32> to vector<8xi32>
      %97 = vector.shape_cast %96 : vector<8xi32> to vector<8x1xi32>
      %c0_43 = arith.constant 0 : index
      %c0_44 = arith.constant 0 : index
      %98 = vector.load %arg6[%c0_43, %c0_44] : memref<8x128xf32, #tpu.memory_space<vmem>>, vector<8x128xf32>
      %99 = vector.extract_strided_slice %98 {offsets = [0, 0], sizes = [8, 4], strides = [1, 1]} : vector<8x128xf32> to vector<8x4xf32>
      %c0_45 = arith.constant 0 : index
      %c0_46 = arith.constant 0 : index
      %100 = vector.load %arg7[%c0_45, %c0_46] : memref<8x128xi32, #tpu.memory_space<vmem>>, vector<8x128xi32>
      %101 = vector.extract_strided_slice %100 {offsets = [0, 0], sizes = [8, 4], strides = [1, 1]} : vector<8x128xi32> to vector<8x4xi32>
      %102 = tpu.concatenate %99, %55, %67, %79, %91 in 1 : vector<8x4xf32>, vector<8x1xf32>, vector<8x1xf32>, vector<8x1xf32>, vector<8x1xf32> -> vector<8x8xf32>
      %103 = tpu.concatenate %101, %61, %73, %85, %97 in 1 : vector<8x4xi32>, vector<8x1xi32>, vector<8x1xi32>, vector<8x1xi32>, vector<8x1xi32> -> vector<8x8xi32>
      %104 = tpu.iota {dimensions = array<i32: 1>} : vector<8x8xi32>
      %cst_47 = arith.constant dense<0xFF800000> : vector<8xf32>
      %105 = vector.multi_reduction <maximumf>, %102, %cst_47 [1] : vector<8x8xf32> to vector<8xf32>
      %106 = vector.shape_cast %105 : vector<8xf32> to vector<8x1xf32>
      %107 = vector.broadcast %106 : vector<8x1xf32> to vector<8x8xf32>
      %108 = arith.cmpf oge, %102, %107 : vector<8x8xf32>
      %c1073741824_i32_48 = arith.constant 1073741824 : i32
      %109 = vector.broadcast %c1073741824_i32_48 : i32 to vector<8x8xi32>
      %110 = arith.select %108, %104, %109 : vector<8x8xi1>, vector<8x8xi32>
      %cst_49 = arith.constant dense<2147483647> : vector<8xi32>
      %111 = vector.multi_reduction <minsi>, %110, %cst_49 [1] : vector<8x8xi32> to vector<8xi32>
      %112 = vector.shape_cast %111 : vector<8xi32> to vector<8x1xi32>
      %113 = vector.broadcast %112 : vector<8x1xi32> to vector<8x8xi32>
      %114 = arith.cmpi eq, %104, %113 : vector<8x8xi32>
      %c0_i32_50 = arith.constant 0 : i32
      %115 = vector.broadcast %c0_i32_50 : i32 to vector<8x8xi32>
      %116 = arith.select %114, %103, %115 : vector<8x8xi1>, vector<8x8xi32>
      %cst_51 = arith.constant dense<0> : vector<8xi32>
      %117 = vector.multi_reduction <add>, %116, %cst_51 [1] : vector<8x8xi32> to vector<8xi32>
      %118 = vector.shape_cast %117 : vector<8xi32> to vector<8x1xi32>
      %119 = vector.broadcast %112 : vector<8x1xi32> to vector<8x8xi32>
      %120 = arith.cmpi eq, %104, %119 : vector<8x8xi32>
      %cst_52 = arith.constant 0xFF800000 : f32
      %121 = vector.broadcast %cst_52 : f32 to vector<8x8xf32>
      %122 = arith.select %120, %121, %102 : vector<8x8xi1>, vector<8x8xf32>
      %cst_53 = arith.constant dense<0xFF800000> : vector<8xf32>
      %123 = vector.multi_reduction <maximumf>, %122, %cst_53 [1] : vector<8x8xf32> to vector<8xf32>
      %124 = vector.shape_cast %123 : vector<8xf32> to vector<8x1xf32>
      %125 = vector.broadcast %124 : vector<8x1xf32> to vector<8x8xf32>
      %126 = arith.cmpf oge, %122, %125 : vector<8x8xf32>
      %c1073741824_i32_54 = arith.constant 1073741824 : i32
      %127 = vector.broadcast %c1073741824_i32_54 : i32 to vector<8x8xi32>
      %128 = arith.select %126, %104, %127 : vector<8x8xi1>, vector<8x8xi32>
      %cst_55 = arith.constant dense<2147483647> : vector<8xi32>
      %129 = vector.multi_reduction <minsi>, %128, %cst_55 [1] : vector<8x8xi32> to vector<8xi32>
      %130 = vector.shape_cast %129 : vector<8xi32> to vector<8x1xi32>
      %131 = vector.broadcast %130 : vector<8x1xi32> to vector<8x8xi32>
      %132 = arith.cmpi eq, %104, %131 : vector<8x8xi32>
      %c0_i32_56 = arith.constant 0 : i32
      %133 = vector.broadcast %c0_i32_56 : i32 to vector<8x8xi32>
      %134 = arith.select %132, %103, %133 : vector<8x8xi1>, vector<8x8xi32>
      %cst_57 = arith.constant dense<0> : vector<8xi32>
      %135 = vector.multi_reduction <add>, %134, %cst_57 [1] : vector<8x8xi32> to vector<8xi32>
      %136 = vector.shape_cast %135 : vector<8xi32> to vector<8x1xi32>
      %137 = vector.broadcast %130 : vector<8x1xi32> to vector<8x8xi32>
      %138 = arith.cmpi eq, %104, %137 : vector<8x8xi32>
      %cst_58 = arith.constant 0xFF800000 : f32
      %139 = vector.broadcast %cst_58 : f32 to vector<8x8xf32>
      %140 = arith.select %138, %139, %122 : vector<8x8xi1>, vector<8x8xf32>
      %cst_59 = arith.constant dense<0xFF800000> : vector<8xf32>
      %141 = vector.multi_reduction <maximumf>, %140, %cst_59 [1] : vector<8x8xf32> to vector<8xf32>
      %142 = vector.shape_cast %141 : vector<8xf32> to vector<8x1xf32>
      %143 = vector.broadcast %142 : vector<8x1xf32> to vector<8x8xf32>
      %144 = arith.cmpf oge, %140, %143 : vector<8x8xf32>
      %c1073741824_i32_60 = arith.constant 1073741824 : i32
      %145 = vector.broadcast %c1073741824_i32_60 : i32 to vector<8x8xi32>
      %146 = arith.select %144, %104, %145 : vector<8x8xi1>, vector<8x8xi32>
      %cst_61 = arith.constant dense<2147483647> : vector<8xi32>
      %147 = vector.multi_reduction <minsi>, %146, %cst_61 [1] : vector<8x8xi32> to vector<8xi32>
      %148 = vector.shape_cast %147 : vector<8xi32> to vector<8x1xi32>
      %149 = vector.broadcast %148 : vector<8x1xi32> to vector<8x8xi32>
      %150 = arith.cmpi eq, %104, %149 : vector<8x8xi32>
      %c0_i32_62 = arith.constant 0 : i32
      %151 = vector.broadcast %c0_i32_62 : i32 to vector<8x8xi32>
      %152 = arith.select %150, %103, %151 : vector<8x8xi1>, vector<8x8xi32>
      %cst_63 = arith.constant dense<0> : vector<8xi32>
      %153 = vector.multi_reduction <add>, %152, %cst_63 [1] : vector<8x8xi32> to vector<8xi32>
      %154 = vector.shape_cast %153 : vector<8xi32> to vector<8x1xi32>
      %155 = vector.broadcast %148 : vector<8x1xi32> to vector<8x8xi32>
      %156 = arith.cmpi eq, %104, %155 : vector<8x8xi32>
      %cst_64 = arith.constant 0xFF800000 : f32
      %157 = vector.broadcast %cst_64 : f32 to vector<8x8xf32>
      %158 = arith.select %156, %157, %140 : vector<8x8xi1>, vector<8x8xf32>
      %cst_65 = arith.constant dense<0xFF800000> : vector<8xf32>
      %159 = vector.multi_reduction <maximumf>, %158, %cst_65 [1] : vector<8x8xf32> to vector<8xf32>
      %160 = vector.shape_cast %159 : vector<8xf32> to vector<8x1xf32>
      %161 = vector.broadcast %160 : vector<8x1xf32> to vector<8x8xf32>
      %162 = arith.cmpf oge, %158, %161 : vector<8x8xf32>
      %c1073741824_i32_66 = arith.constant 1073741824 : i32
      %163 = vector.broadcast %c1073741824_i32_66 : i32 to vector<8x8xi32>
      %164 = arith.select %162, %104, %163 : vector<8x8xi1>, vector<8x8xi32>
      %cst_67 = arith.constant dense<2147483647> : vector<8xi32>
      %165 = vector.multi_reduction <minsi>, %164, %cst_67 [1] : vector<8x8xi32> to vector<8xi32>
      %166 = vector.shape_cast %165 : vector<8xi32> to vector<8x1xi32>
      %167 = vector.broadcast %166 : vector<8x1xi32> to vector<8x8xi32>
      %168 = arith.cmpi eq, %104, %167 : vector<8x8xi32>
      %c0_i32_68 = arith.constant 0 : i32
      %169 = vector.broadcast %c0_i32_68 : i32 to vector<8x8xi32>
      %170 = arith.select %168, %103, %169 : vector<8x8xi1>, vector<8x8xi32>
      %cst_69 = arith.constant dense<0> : vector<8xi32>
      %171 = vector.multi_reduction <add>, %170, %cst_69 [1] : vector<8x8xi32> to vector<8xi32>
      %172 = vector.shape_cast %171 : vector<8xi32> to vector<8x1xi32>
      %cst_70 = arith.constant 0xFF800000 : f32
      %173 = vector.broadcast %cst_70 : f32 to vector<8x124xf32>
      %c0_i32_71 = arith.constant 0 : i32
      %174 = vector.broadcast %c0_i32_71 : i32 to vector<8x124xi32>
      %175 = tpu.concatenate %106, %124, %142, %160, %173 in 1 : vector<8x1xf32>, vector<8x1xf32>, vector<8x1xf32>, vector<8x1xf32>, vector<8x124xf32> -> vector<8x128xf32>
      %c0_72 = arith.constant 0 : index
      %c0_73 = arith.constant 0 : index
      %176 = vector.load %arg6[%c0_72, %c0_73] : memref<8x128xf32, #tpu.memory_space<vmem>>, vector<8x128xf32>
      tpu.vector_store %arg6[%c0_72, %c0_73], %175 {strides = array<i32>} : memref<8x128xf32, #tpu.memory_space<vmem>>, vector<8x128xf32>,
      %177 = tpu.concatenate %118, %136, %154, %172, %174 in 1 : vector<8x1xi32>, vector<8x1xi32>, vector<8x1xi32>, vector<8x1xi32>, vector<8x124xi32> -> vector<8x128xi32>
      %c0_74 = arith.constant 0 : index
      %c0_75 = arith.constant 0 : index
      %178 = vector.load %arg7[%c0_74, %c0_75] : memref<8x128xi32, #tpu.memory_space<vmem>>, vector<8x128xi32>
      tpu.vector_store %arg7[%c0_74, %c0_75], %177 {strides = array<i32>} : memref<8x128xi32, #tpu.memory_space<vmem>>, vector<8x128xi32>,
    } else {
    }
    %c3_i32 = arith.constant 3 : i32
    %51 = arith.cmpi eq, %arg1, %c3_i32 : i32
    %52 = arith.extui %51 : i1 to i32
    %c0_i32_28 = arith.constant 0 : i32
    %53 = arith.cmpi ne, %52, %c0_i32_28 : i32
    scf.if %53 {
      %c0_29 = arith.constant 0 : index
      %c0_30 = arith.constant 0 : index
      %54 = vector.load %arg8[%c0_29, %c0_30] : memref<8x1xf32, #tpu.memory_space<vmem>>, vector<8x1xf32>
      %c0_31 = arith.constant 0 : index
      %c0_32 = arith.constant 0 : index
      %55 = vector.load %arg9[%c0_31, %c0_32] : memref<8x1xf32, #tpu.memory_space<vmem>>, vector<8x1xf32>
      %56 = math.log %55 : vector<8x1xf32>
      %57 = arith.addf %54, %56 : vector<8x1xf32>
      %c0_33 = arith.constant 0 : index
      %c0_34 = arith.constant 0 : index
      %58 = vector.load %arg6[%c0_33, %c0_34] : memref<8x128xf32, #tpu.memory_space<vmem>>, vector<8x128xf32>
      %59 = vector.broadcast %57 : vector<8x1xf32> to vector<8x128xf32>
      %60 = arith.subf %58, %59 : vector<8x128xf32>
      %c0_35 = arith.constant 0 : index
      %c0_36 = arith.constant 0 : index
      %61 = vector.load %arg6[%c0_35, %c0_36] : memref<8x128xf32, #tpu.memory_space<vmem>>, vector<8x128xf32>
      tpu.vector_store %arg6[%c0_35, %c0_36], %60 {strides = array<i32>} : memref<8x128xf32, #tpu.memory_space<vmem>>, vector<8x128xf32>,
    } else {
    }
    return
  }
  func.func @transform_0(%arg0: i32, %arg1: i32) -> (i32, i32) {
    %c0_i32 = arith.constant 0 : i32
    %c0_i32_0 = arith.constant 0 : i32
    return %arg0, %c0_i32 : i32, i32
  }
  func.func @transform_1(%arg0: i32, %arg1: i32) -> (i32, i32) {
    %c0_i32 = arith.constant 0 : i32
    %c0_i32_0 = arith.constant 0 : i32
    return %c0_i32, %arg1 : i32, i32
  }
  func.func @transform_2(%arg0: i32, %arg1: i32) -> (i32, i32) {
    %c0_i32 = arith.constant 0 : i32
    %c0_i32_0 = arith.constant 0 : i32
    return %c0_i32, %arg1 : i32, i32
  }
  func.func @transform_3(%arg0: i32, %arg1: i32) -> (i32, i32) {
    %c0_i32 = arith.constant 0 : i32
    %c0_i32_0 = arith.constant 0 : i32
    return %arg0, %c0_i32 : i32, i32
  }
  func.func @transform_4(%arg0: i32, %arg1: i32) -> (i32, i32) {
    %c0_i32 = arith.constant 0 : i32
    %c0_i32_0 = arith.constant 0 : i32
    return %arg0, %c0_i32 : i32, i32
  }
  func.func @transform_5(%arg0: i32, %arg1: i32) -> (i32, i32) {
    %c0_i32 = arith.constant 0 : i32
    %c0_i32_0 = arith.constant 0 : i32
    return %arg0, %c0_i32 : i32, i32
  }
}

</mosaic_0001>

<llo_original>
// kernel: _decode.1
$region0: #{_decode.1}
  #allocation0 [shape = 'u32[]', space=smem, size = 0x4, offset = 0x4, fixed_abs, tag = 'smem constant byte address 0x4 - core index']
  #allocation1 [shape = 'u32[144,128]{1,0:T(1,128)}', space=vmem, size = 0x12000, scoped, tag = 'internal scratch']
  #allocation2 [shape = 'f32[8,1]{1,0:T(8,128)}', space=vmem, size = 0x1000, scoped, tag = 'scratch operand']
  #allocation3 [shape = 'f32[8,1]{1,0:T(8,128)}', space=vmem, size = 0x1000, scoped, tag = 'scratch operand']
  %s0 = inlined_call_operand.vmem [shape: bf16[8,128], index: 0, kind: input, shape index: {}]
  %s1 = inlined_call_operand.hbm [shape: bf16[128,1024], index: 1, kind: input, shape index: {}]
  %s2 = inlined_call_operand.vmem [shape: f32[1,1024], index: 2, kind: input, shape index: {}]
  %s3 = inlined_call_operand.vmem [shape: s32[8,1], index: 3, kind: input, shape index: {}]
  %s4 = inlined_call_operand.vmem [shape: f32[8,128], index: 4, kind: output, shape index: {0}]
  %s5 = inlined_call_operand.vmem [shape: s32[8,128], index: 5, kind: output, shape index: {1}]
  %6 = xla_tuple %s4, %s5
  %s7 = sld [smem:[#allocation0]]
  $region73: #{_decode.1} parent=0
    _
  %s9 = ssub.s32 1, %s7
  %s10 = scalar_select 0, %s9, %s7
  $region1: #{_decode.1} parent=0
    #allocation4 [shape = 'u8[131072]{0}', space=vmem, size = 0x20000, scoped, tag = 'input window, operand 1']
    #allocation5 [shape = 's32[2]{0}', space=sflag, size = 0x8, scoped, tag = 'scoped memory for _decode.1']
    %11 = vsyncpa [#allocation5], 0
    %s12 = scalar_lea.sflag [#allocation5], 1
    %13 = vsyncpa %s12, 0
    loop: start=0, step=1, limit=6
    $region2: #{_decode.1} parent=1 // loop_pre_header
      _
    $region3: #{_decode.1} parent=1 // loop_header
      %s15 = sphi 0, %s19
      %p16 = scmp.ge.s32.totalorder %s15, 6
      %s22 = sphi 0, %s34
      %s23 = sphi 0, %s30
      %s24 = sphi 0, %s22
      %s25 = sphi 0, %s23
      %s26 = sphi 0, %s24
      %s27 = sphi 0, %s25
      %s37 = sphi 0, %s39
      %s40 = sphi 0, %s37
      %s41 = sphi 0, %s40
      %s57 = sphi 0, %s41
      %s63 = sphi 0, %s65
      %s66 = sphi 0, %s63
      %s67 = sphi 0, %s66
      %s83 = sphi 0, %s67
      %s89 = sphi 0, %s91
      %s92 = sphi 0, %s89
      %s93 = sphi 0, %s92
      %s109 = sphi 0, %s93
      %s115 = sphi 0, %s117
      %s118 = sphi 0, %s115
      %s119 = sphi 0, %s118
      %s135 = sphi 0, %s119
      %s141 = sphi 0, %s143
      %s144 = sphi 0, %s141
      %s145 = sphi 0, %s144
      %s161 = sphi 0, %s145
      %s167 = sphi 0, %s169
      %s170 = sphi 0, %s167
      %s171 = sphi 0, %s170
      %s187 = sphi 0, %s171
    $region4: #{_decode.1} parent=1 // loop_header_branch
      %18 = sbr.rel (%p16) target = $region8
    $region5: #{_decode.1} parent=1 // loop_body
      %s20 = ssub.s32 %s15, 1
      %s21 = ssub.s32 %s15, 2
      %s28 = sadd.s32 1, %s23
      %p29 = scmp.ge.s32.totalorder %s28, 4
      %s30 = scalar_select %p29, 0, %s28
      %s31 = sadd.s32 1, %s22
      %s32 = scalar_select %p29, %s31, %s22
      %p33 = scmp.ge.s32.totalorder %s32, 1
      %s34 = scalar_select %p33, 0, %s32
      %s35 = ssub.s32 %s22, %s34
      %p36 = scmp.eq.s32.totalorder %s35, 0
      %s38 = sadd.s32 %s37, 1
      %s39 = scalar_select %p36, %s37, %s38
      %p42 = pneg %p36
      %p43 = scmp.eq.s32.totalorder %s15, 3
      %p44 = por %p42, %p43
      %p45 = scmp.ne.s32.totalorder %s37, %s40
      %p46 = scmp.eq.s32.totalorder %s15, 0
      %p47 = por %p45, %p46
      %p48 = scmp.ne.s32.totalorder %s37, %s40
      %p49 = scmp.eq.s32.totalorder %s20, 3
      %p50 = por %p48, %p49
      %p51 = scmp.ne.s32.totalorder %s40, %s41
      %p52 = scmp.eq.s32.totalorder %s20, 0
      %p53 = por %p51, %p52
      %p54 = scmp.ne.s32.totalorder %s40, %s41
      %p55 = scmp.eq.s32.totalorder %s21, 3
      %p56 = por %p54, %p55
      %p58 = scmp.ne.s32.totalorder %s41, %s57
      %p59 = scmp.eq.s32.totalorder %s21, 0
      %p60 = por %p58, %p59
      %s61 = ssub.s32 %s23, %s30
      %p62 = scmp.eq.s32.totalorder %s61, 0
      %s64 = sadd.s32 %s63, 1
      %s65 = scalar_select %p62, %s63, %s64
      %p68 = pneg %p62
      %p69 = scmp.eq.s32.totalorder %s15, 3
      %p70 = por %p68, %p69
      %p71 = scmp.ne.s32.totalorder %s63, %s66
      %p72 = scmp.eq.s32.totalorder %s15, 0
      %p73 = por %p71, %p72
      %p74 = scmp.ne.s32.totalorder %s63, %s66
      %p75 = scmp.eq.s32.totalorder %s20, 3
      %p76 = por %p74, %p75
      %p77 = scmp.ne.s32.totalorder %s66, %s67
      %p78 = scmp.eq.s32.totalorder %s20, 0
      %p79 = por %p77, %p78
      %p80 = scmp.ne.s32.totalorder %s66, %s67
      %p81 = scmp.eq.s32.totalorder %s21, 3
      %p82 = por %p80, %p81
      %p84 = scmp.ne.s32.totalorder %s67, %s83
      %p85 = scmp.eq.s32.totalorder %s21, 0
      %p86 = por %p84, %p85
      %s87 = ssub.s32 %s23, %s30
      %p88 = scmp.eq.s32.totalorder %s87, 0
      %s90 = sadd.s32 %s89, 1
      %s91 = scalar_select %p88, %s89, %s90
      %p94 = pneg %p88
      %p95 = scmp.eq.s32.totalorder %s15, 3
      %p96 = por %p94, %p95
      %p97 = scmp.ne.s32.totalorder %s89, %s92
      %p98 = scmp.eq.s32.totalorder %s15, 0
      %p99 = por %p97, %p98
      %p100 = scmp.ne.s32.totalorder %s89, %s92
      %p101 = scmp.eq.s32.totalorder %s20, 3
      %p102 = por %p100, %p101
      %p103 = scmp.ne.s32.totalorder %s92, %s93
      %p104 = scmp.eq.s32.totalorder %s20, 0
      %p105 = por %p103, %p104
      %p106 = scmp.ne.s32.totalorder %s92, %s93
      %p107 = scmp.eq.s32.totalorder %s21, 3
      %p108 = por %p106, %p107
      %p110 = scmp.ne.s32.totalorder %s93, %s109
      %p111 = scmp.eq.s32.totalorder %s21, 0
      %p112 = por %p110, %p111
      %s113 = ssub.s32 %s22, %s34
      %p114 = scmp.eq.s32.totalorder %s113, 0
      %s116 = sadd.s32 %s115, 1
      %s117 = scalar_select %p114, %s115, %s116
      %p120 = pneg %p114
      %p121 = scmp.eq.s32.totalorder %s15, 3
      %p122 = por %p120, %p121
      %p123 = scmp.ne.s32.totalorder %s115, %s118
      %p124 = scmp.eq.s32.totalorder %s15, 0
      %p125 = por %p123, %p124
      %p126 = scmp.ne.s32.totalorder %s115, %s118
      %p127 = scmp.eq.s32.totalorder %s20, 3
      %p128 = por %p126, %p127
      %p129 = scmp.ne.s32.totalorder %s118, %s119
      %p130 = scmp.eq.s32.totalorder %s20, 0
      %p131 = por %p129, %p130
      %p132 = scmp.ne.s32.totalorder %s118, %s119
      %p133 = scmp.eq.s32.totalorder %s21, 3
      %p134 = por %p132, %p133
      %p136 = scmp.ne.s32.totalorder %s119, %s135
      %p137 = scmp.eq.s32.totalorder %s21, 0
      %p138 = por %p136, %p137
      %s139 = ssub.s32 %s22, %s34
      %p140 = scmp.eq.s32.totalorder %s139, 0
      %s142 = sadd.s32 %s141, 1
      %s143 = scalar_select %p140, %s141, %s142
      %p146 = pneg %p140
      %p147 = scmp.eq.s32.totalorder %s15, 3
      %p148 = por %p146, %p147
      %p149 = scmp.ne.s32.totalorder %s141, %s144
      %p150 = scmp.eq.s32.totalorder %s15, 0
      %p151 = por %p149, %p150
      %p152 = scmp.ne.s32.totalorder %s141, %s144
      %p153 = scmp.eq.s32.totalorder %s20, 3
      %p154 = por %p152, %p153
      %p155 = scmp.ne.s32.totalorder %s144, %s145
      %p156 = scmp.eq.s32.totalorder %s20, 0
      %p157 = por %p155, %p156
      %p158 = scmp.ne.s32.totalorder %s144, %s145
      %p159 = scmp.eq.s32.totalorder %s21, 3
      %p160 = por %p158, %p159
      %p162 = scmp.ne.s32.totalorder %s145, %s161
      %p163 = scmp.eq.s32.totalorder %s21, 0
      %p164 = por %p162, %p163
      %s165 = ssub.s32 %s22, %s34
      %p166 = scmp.eq.s32.totalorder %s165, 0
      %s168 = sadd.s32 %s167, 1
      %s169 = scalar_select %p166, %s167, %s168
      %p172 = pneg %p166
      %p173 = scmp.eq.s32.totalorder %s15, 3
      %p174 = por %p172, %p173
      %p175 = scmp.ne.s32.totalorder %s167, %s170
      %p176 = scmp.eq.s32.totalorder %s15, 0
      %p177 = por %p175, %p176
      %p178 = scmp.ne.s32.totalorder %s167, %s170
      %p179 = scmp.eq.s32.totalorder %s20, 3
      %p180 = por %p178, %p179
      %p181 = scmp.ne.s32.totalorder %s170, %s171
      %p182 = scmp.eq.s32.totalorder %s20, 0
      %p183 = por %p181, %p182
      %p184 = scmp.ne.s32.totalorder %s170, %s171
      %p185 = scmp.eq.s32.totalorder %s21, 3
      %p186 = por %p184, %p185
      %p188 = scmp.ne.s32.totalorder %s171, %s187
      %p189 = scmp.eq.s32.totalorder %s21, 0
      %p190 = por %p188, %p189
      %p191 = scmp.le.s32.totalorder 1, %s15
      %p192 = scmp.lt.s32.totalorder %s15, 5
      %p193 = pnand %p191, %p192
      %p194 = pneg %p193
      // Predicated region
      $region9: #{_decode.1} parent=5 // pred_check
        _
      $region10: #{_decode.1} parent=5 // pred_check_branch
        %196 = sbr.rel (%p193) target = $region12
      $region11: #{_decode.1} parent=5 // pred_region
        %s197 = ssub.s32 %s15, 1
        // Predicated region
        $region13: #{_decode.1} parent=11 // pred_check
          %p198 = pneg %p53
        $region14: #{_decode.1} parent=11 // pred_check_branch
          %200 = sbr.rel (%p198) target = $region16
        $region15: #{_decode.1} parent=11 // pred_region
          %p201 = scmp.lt.s32.totalorder %s24, 0
          %s202 = scalar_select %p201, %s24, 0
          %s203 = smul.addr %s202, 4
          %s204 = scalar_lea.vmem %s0, %s203
        $region16: #{_decode.1} parent=11 // pred_fallthru
          _
        // Predicated region
        $region17: #{_decode.1} parent=11 // pred_check
          %p205 = pneg %p131
        $region18: #{_decode.1} parent=11 // pred_check_branch
          %207 = sbr.rel (%p205) target = $region20
        $region19: #{_decode.1} parent=11 // pred_region
          %p208 = scmp.lt.s32.totalorder %s24, 0
          %s209 = scalar_select %p208, %s24, 0
          %s210 = smul.addr %s209, 8
          %s211 = scalar_lea.vmem %s3, %s210
        $region20: #{_decode.1} parent=11 // pred_fallthru
          _
      $region12: #{_decode.1} parent=5 // pred_fallthru
        _
      %p212 = scmp.lt.s32.totalorder %s15, 4
      // Predicated region
      $region21: #{_decode.1} parent=5 // pred_check
        %p213 = pneg %p212
      $region22: #{_decode.1} parent=5 // pred_check_branch
        %215 = sbr.rel (%p213) target = $region24
      $region23: #{_decode.1} parent=5 // pred_region
        // Predicated region
        $region25: #{_decode.1} parent=23 // pred_check
          %p216 = pneg %p73
        $region26: #{_decode.1} parent=23 // pred_check_branch
          %218 = sbr.rel (%p216) target = $region28
        $region27: #{_decode.1} parent=23 // pred_region
          %s219 = sand.u32 %s63, 1
          %s220 = scalar_lea.sflag [#allocation5], %s219
          %s221 = sand.u32 %s63, 1
          %s222 = smul.addr %s221, 128
          %s223 = scalar_lea.vmem [#allocation4], %s222
          %s224 = smul.u32 2, %s23
          %s226 = ssub.s32 2048, 2048
          %227 = vsyncadd %s220, %s226
          %s228 = smul.addr %s224, 64
          %s229 = scalar_lea.hbm %s1, %s228
          %s230 = sshll.u32 %s223, 4
          %s231 = int_to_ptr.vmem [resolvable:$true] %s230
          %236 = dma.hbm_to_vmem [thread:$0]  %s229, 2048, %s231, %s220, 512, 128, 8
        $region28: #{_decode.1} parent=23 // pred_fallthru
          _
        // Predicated region
        $region29: #{_decode.1} parent=23 // pred_check
          %p237 = pneg %p99
        $region30: #{_decode.1} parent=23 // pred_check_branch
          %239 = sbr.rel (%p237) target = $region32
        $region31: #{_decode.1} parent=23 // pred_region
          %s240 = smul.u32 2, %s23
          %p241 = scmp.lt.s32.totalorder %s240, 7
          %s242 = scalar_select %p241, %s240, 7
          %s243 = scalar_lea.vmem %s2, %s242
          %s244 = smul.u32 2, %s23
        $region32: #{_decode.1} parent=23 // pred_fallthru
          _
      $region24: #{_decode.1} parent=5 // pred_fallthru
        _
      %p245 = scmp.le.s32.totalorder 1, %s15
      %p246 = scmp.lt.s32.totalorder %s15, 5
      %p247 = pnand %p245, %p246
      %p248 = pneg %p247
      // Predicated region
      $region33: #{_decode.1} parent=5 // pred_check
        _
      $region34: #{_decode.1} parent=5 // pred_check_branch
        %250 = sbr.rel (%p247) target = $region36
      $region35: #{_decode.1} parent=5 // pred_region
        %s251 = ssub.s32 %s15, 1
        %s252 = sand.u32 %s66, 1
        %s253 = scalar_lea.sflag [#allocation5], %s252
        %s254 = sand.u32 %s66, 1
        %s255 = smul.addr %s254, 128
        %s256 = scalar_lea.vmem [#allocation4], %s255
        // Predicated region
        $region37: #{_decode.1} parent=35 // pred_check
          %p257 = pneg %p79
        $region38: #{_decode.1} parent=35 // pred_check_branch
          %259 = sbr.rel (%p257) target = $region40
        $region39: #{_decode.1} parent=35 // pred_region
          %260 = dma.done %s253, 2048
        $region40: #{_decode.1} parent=35 // pred_fallthru
          _
        %p261 = scmp.lt.s32.totalorder %s24, 0
        %s262 = scalar_select %p261, %s24, 0
        %s263 = smul.addr %s262, 4
        %s264 = scalar_lea.vmem %s0, %s263
        %p265 = pneg %p53
        %p266 = pneg %p50
        %s267 = sand.u32 %s66, 1
        %s268 = scalar_lea.sflag [#allocation5], %s267
        %s269 = sand.u32 %s66, 1
        %s270 = smul.addr %s269, 128
        %s271 = scalar_lea.vmem [#allocation4], %s270
        %p272 = pneg %p79
        %p273 = pneg %p76
        %s274 = smul.u32 2, %s25
        %p275 = scmp.lt.s32.totalorder %s274, 7
        %s276 = scalar_select %p275, %s274, 7
        %s277 = scalar_lea.vmem %s2, %s276
        %p278 = pneg %p105
        %p279 = pneg %p102
        %p280 = scmp.lt.s32.totalorder %s24, 0
        %s281 = scalar_select %p280, %s24, 0
        %s282 = smul.addr %s281, 8
        %s283 = scalar_lea.vmem %s3, %s282
        %p284 = pneg %p131
        %p285 = pneg %p128
        %p286 = pneg %p157
        %p287 = pneg %p154
        %p288 = scmp.lt.s32.totalorder %s24, 0
        %s289 = scalar_select %p288, %s24, 0
        %s290 = smul.addr %s289, 8
        %s291 = scalar_lea.vmem %s4, %s290
        %p292 = pneg %p183
        %p293 = pneg %p180
        %p294 = scmp.lt.s32.totalorder %s24, 0
        %s295 = scalar_select %p294, %s24, 0
        %s296 = smul.addr %s295, 8
        %s297 = scalar_lea.vmem %s5, %s296
        %p298 = scmp.lt.s32.totalorder %s24, 0
        %s299 = scalar_select %p298, %s24, 0
        %s300 = smul.addr %s299, 4
        %s301 = scalar_lea.vmem %s0, %s300
        %s302 = smul.u32 2, %s25
        %s303 = smul.u32 2, %s25
        %p304 = scmp.lt.s32.totalorder %s303, 7
        %s305 = scalar_select %p304, %s303, 7
        %s306 = scalar_lea.vmem %s2, %s305
        %s307 = smul.u32 2, %s25
        %p308 = scmp.lt.s32.totalorder %s24, 0
        %s309 = scalar_select %p308, %s24, 0
        %s310 = smul.addr %s309, 8
        %s311 = scalar_lea.vmem %s3, %s310
        %p312 = scmp.lt.s32.totalorder %s24, 0
        %s313 = scalar_select %p312, %s24, 0
        %s314 = smul.addr %s313, 8
        %s315 = scalar_lea.vmem %s4, %s314
        %p316 = scmp.lt.s32.totalorder %s24, 0
        %s317 = scalar_select %p316, %s24, 0
        %s318 = smul.addr %s317, 8
        %s319 = scalar_lea.vmem %s5, %s318
        %p321 = scmp.eq.s32.totalorder %s25, 0
        // Predicated region
        $region41: #{_decode.1} parent=35 // pred_check
          %p322 = pneg %p321
        $region42: #{_decode.1} parent=35 // pred_check_branch
          %324 = sbr.rel (%p322) target = $region44
        $region43: #{_decode.1} parent=35 // pred_region
          %vm325 = vcmask 7168
          %326 = vst.msk [vmem:[#allocation2] sm:$0xff] %vm325, -inf
          %327 = vst.msk [vmem:[#allocation3] sm:$0xff] %vm325, 0.0
          %328 = vst [vmem:[%s315] sm:$0xff] -inf
          %329 = vst [vmem:[%s319] sm:$0xff] 0
        $region44: #{_decode.1} parent=35 // pred_fallthru
          _
        %v330 = vld [vmem:[%s301] sm:$0xf]
        %v331 = vld [vmem:[%s256] sm:$0xff]
        %v332 = vld [vmem:[%s256 + $0x8] sm:$0xff]
        %v333 = vld [vmem:[%s256 + $0x10] sm:$0xff]
        %v334 = vld [vmem:[%s256 + $0x18] sm:$0xff]
        %v335 = vld [vmem:[%s256 + $0x20] sm:$0xff]
        %v336 = vld [vmem:[%s256 + $0x28] sm:$0xff]
        %v337 = vld [vmem:[%s256 + $0x30] sm:$0xff]
        %v338 = vld [vmem:[%s256 + $0x38] sm:$0xff]
        %v339 = vld [vmem:[%s256 + $0x40] sm:$0xff]
        %v340 = vld [vmem:[%s256 + $0x48] sm:$0xff]
        %v341 = vld [vmem:[%s256 + $0x50] sm:$0xff]
        %v342 = vld [vmem:[%s256 + $0x58] sm:$0xff]
        %v343 = vld [vmem:[%s256 + $0x60] sm:$0xff]
        %v344 = vld [vmem:[%s256 + $0x68] sm:$0xff]
        %v345 = vld [vmem:[%s256 + $0x70] sm:$0xff]
        %v346 = vld [vmem:[%s256 + $0x78] sm:$0xff]
        %v347 = vld [vmem:[%s306] sm:$0x3]
        %v349 = vlaneseq
        %v350 = vshrl.u32 %v349, 7
        %v351 = vsub.s32 0, %v350
        %v352 = vrot.slane %v347, %v351
        %v353 = vlaneseq
        %v354 = vshrl.u32 %v353, 7
        %v355 = vsub.s32 1, %v354
        %v356 = vrot.slane %v347, %v355
        %v375 = vunpack.c.l.b16 %v331
        %v376 = vunpack.c.h.b16 %v331
        %v377 = vunpack.c.l.b16 %v332
        %v378 = vunpack.c.h.b16 %v332
        %v379 = vunpack.c.l.b16 %v333
        %v380 = vunpack.c.h.b16 %v333
        %v381 = vunpack.c.l.b16 %v334
        %v382 = vunpack.c.h.b16 %v334
        %v383 = vunpack.c.l.b16 %v335
        %v384 = vunpack.c.h.b16 %v335
        %v385 = vunpack.c.l.b16 %v336
        %v386 = vunpack.c.h.b16 %v336
        %v387 = vunpack.c.l.b16 %v337
        %v388 = vunpack.c.h.b16 %v337
        %v389 = vunpack.c.l.b16 %v338
        %v390 = vunpack.c.h.b16 %v338
        %v391 = vunpack.c.l.b16 %v339
        %v392 = vunpack.c.h.b16 %v339
        %v393 = vunpack.c.l.b16 %v340
        %v394 = vunpack.c.h.b16 %v340
        %v395 = vunpack.c.l.b16 %v341
        %v396 = vunpack.c.h.b16 %v341
        %v397 = vunpack.c.l.b16 %v342
        %v398 = vunpack.c.h.b16 %v342
        %v399 = vunpack.c.l.b16 %v343
        %v400 = vunpack.c.h.b16 %v343
        %v401 = vunpack.c.l.b16 %v344
        %v402 = vunpack.c.h.b16 %v344
        %v403 = vunpack.c.l.b16 %v345
        %v404 = vunpack.c.h.b16 %v345
        %v405 = vunpack.c.l.b16 %v346
        %v406 = vunpack.c.h.b16 %v346
        %v407 = vpack.c.b16 %v377, %v375
        %v408 = vpack.c.b16 %v378, %v376
        %v409 = vpack.c.b16 %v381, %v379
        %v410 = vpack.c.b16 %v382, %v380
        %v411 = vpack.c.b16 %v385, %v383
        %v412 = vpack.c.b16 %v386, %v384
        %v413 = vpack.c.b16 %v389, %v387
        %v414 = vpack.c.b16 %v390, %v388
        %v415 = vpack.c.b16 %v393, %v391
        %v416 = vpack.c.b16 %v394, %v392
        %v417 = vpack.c.b16 %v397, %v395
        %v418 = vpack.c.b16 %v398, %v396
        %v419 = vpack.c.b16 %v401, %v399
        %v420 = vpack.c.b16 %v402, %v400
        %v421 = vpack.c.b16 %v405, %v403
        %v422 = vpack.c.b16 %v406, %v404
        %439 = vmatprep.subr.bf16.mxu0 %v422
        %440 = vmatpush1.bf16.msra.mxu0 %v421
        %441 = vmatprep.subr.bf16.mxu0 %v420
        %442 = vmatpush1.bf16.msra.mxu0 %v419
        %443 = vmatprep.subr.bf16.mxu0 %v418
        %444 = vmatpush1.bf16.msra.mxu0 %v417
        %445 = vmatprep.subr.bf16.mxu0 %v416
        %446 = vmatpush1.bf16.msra.mxu0 %v415
        %447 = vmatprep.subr.bf16.mxu0 %v414
        %448 = vmatpush1.bf16.msra.mxu0 %v413
        %449 = vmatprep.subr.bf16.mxu0 %v412
        %450 = vmatpush1.bf16.msra.mxu0 %v411
        %451 = vmatprep.subr.bf16.mxu0 %v410
        %452 = vmatpush1.bf16.msra.mxu0 %v409
        %453 = vmatprep.subr.bf16.mxu0 %v408
        %454 = vmatpush1.bf16.msra.mxu0 %v407
        %455 = vmatprep.subr.bf16.mxu0 0
        %456 = vmatpush2.bf16.msra.mxu0 0
        %457 = vmatprep.subr.bf16.mxu0 0
        %458 = vmatpush2.bf16.msra.mxu0 0
        %459 = vmatprep.subr.bf16.mxu0 0
        %460 = vmatpush2.bf16.msra.mxu0 0
        %461 = vmatprep.subr.bf16.mxu0 0
        %462 = vmatpush2.bf16.msra.mxu0 0
        %463 = vmatprep.subr.bf16.mxu0 0
        %464 = vmatpush2.bf16.msra.mxu0 0
        %465 = vmatprep.subr.bf16.mxu0 0
        %466 = vmatpush2.bf16.msra.mxu0 0
        %467 = vmatprep.subr.bf16.mxu0 0
        %468 = vmatpush2.bf16.msra.mxu0 0
        %469 = vmatprep.subr.bf16.mxu0 0
        %470 = vmatpush2.bf16.msra.mxu0 0
        %471 = vmatprep.mubr.bf16.mxu0 0
        %472 = vmatmul.mubr.bf16.gmra.mxu0 %v330
        %v473 = vpop.f32.mrf.mxu0
        %v474 = vadd.f32 %v352, %v473
        %v475 = vpop.f32.mrf.mxu0
        %v476 = vadd.f32 %v356, %v475
        %v477 = vpop.f32.mrf.mxu0
        %v478 = vpop.f32.mrf.mxu0
        %479 = vdwg.mxu0
        %v480 = vlaneseq
        %v481 = vand.u32 %v480, 127
        %v482 = vadd.s32 %v481, 128
        %s483 = smul.u32 %s25, 256
        %v484 = vstv %s483
        %v485 = vadd.s32 %v481, %v484
        %v486 = vadd.s32 %v482, %v484
        %v487 = vld [vmem:[%s311] sm:$0xff]
        %488 = vset.pattern.permute.xlu0 0
        %489 = vperm.xlu0 %488, %v487
        %v490 = vpop.permute.xlu0 %489
        %vm491 = vcmp.eq.s32.totalorder %v485, %v490
        %vm492 = vcmp.eq.s32.totalorder %v486, %v490
        %v493 = vsel %vm491, -1e-16, 0.0
        %v494 = vsel %vm492, -1e-16, 0.0
        %v495 = vadd.f32 %v474, %v493
        %v496 = vadd.f32 %v476, %v494
        %v497 = vmax.f32 %v495, %v496
        %498 = vmax.xlane.f32.xlu0 %v497
        %v499 = vpop.xlane.xlu0 %498
        %v500 = vld [vmem:[#allocation2] sm:$0xff]
        %v501 = vmax.f32 %v500, %v499
        %v502 = vld [vmem:[#allocation3] sm:$0xff]
        %v503 = vsub.f32 %v500, %v501
        %v504 = vmul.f32 %v503, 1.442695
        %v505 = vpow.pop %v504
        %v506 = vmul.f32 %v502, %v505
        %508 = vset.pattern.permute.xlu0 0
        %509 = vperm.xlu0 %508, %v501
        %v510 = vpop.permute.xlu0 %509
        %v512 = vsub.f32 %v495, %v510
        %v513 = vsub.f32 %v496, %v510
        %v514 = vmul.f32 %v512, 1.442695
        %v515 = vpow.pop %v514
        %v516 = vmul.f32 %v513, 1.442695
        %v517 = vpow.pop %v516
        %v518 = vadd.f32 %v515, %v517
        %519 = vadd.xlane.f32.xlu0 %v518
        %v520 = vpop.xlane.xlu0 %519
        %v521 = vadd.f32 %v506, %v520
        %vm522 = vcmask 7168
        %523 = vst.msk [vmem:[#allocation3] sm:$0xff] %vm522, %v521
        %524 = vst.msk [vmem:[#allocation2] sm:$0xff] %vm522, %v501
        %v525 = vld [vmem:[%s315] sm:$0xff]
        %vm526 = vcmp.gt.f32.partialorder %v499, %v525
        %v527 = vsel %vm526, 1.0, 0.0
        %vm528 = vcmask 31768
        %v529 = vsel %vm528, %v527, -inf
        %530 = vmax.xlane.f32.xlu0 %v529
        %v531 = vpop.xlane.xlu0 %530
        %v532 = vrot.slane %v531, 4
        %v533 = vmax.f32 %v531, %v532
        %v534 = vrot.slane %v533, 2
        %v535 = vmax.f32 %v533, %v534
        %v536 = vrot.slane %v535, 1
        %v537 = vmax.f32 %v535, %v536
        %s538 = vtos %v537
        %p539 = scmp.gt.f32.partialorder %s538, 0.0
        %p540 = por %p321, %p539
        // Predicated region
        $region45: #{_decode.1} parent=35 // pred_check
          %p541 = pneg %p540
        $region46: #{_decode.1} parent=35 // pred_check_branch
          %543 = sbr.rel (%p541) target = $region48
        $region47: #{_decode.1} parent=35 // pred_region
          %vm544 = vcmp.ge.f32.partialorder %v495, %v499
          %vm545 = vcmp.ge.f32.partialorder %v496, %v499
          %v546 = vsel %vm544, %v485, 1073741824
          %v547 = vsel %vm545, %v486, 1073741824
          %vm548 = vcmp.lt.s32.totalorder %v546, %v547
          %v549 = vsel %vm548, %v546, %v547
          %v550 = vand.u32 %v549, 65535
          %v551 = vshra.s32 %v549, 16
          %v552 = vcvt.s32.f32 %v550
          %v553 = vcvt.s32.f32 %v551
          %554 = vmin.xlane.f32.xlu0 %v553
          %v555 = vpop.xlane.xlu0 %554
          %vm556 = vcmp.eq.f32.partialorder %v553, %v555
          %v557 = vsel %vm556, %v552, inf
          %558 = vmin.xlane.f32.xlu0 %v557
          %v559 = vpop.xlane.xlu0 %558
          %v560 = vcvt.f32.s32 %v559
          %v561 = vcvt.f32.s32 %v555
          %v562 = vshll.u32 %v561, 16
          %v563 = vadd.s32 %v562, %v560
          %vm564 = vcmp.eq.s32.totalorder %v485, %v563
          %vm565 = vcmp.eq.s32.totalorder %v486, %v563
          %v566 = vsel %vm564, -inf, %v495
          %v567 = vsel %vm565, -inf, %v496
          %v568 = vmax.f32 %v566, %v567
          %569 = vmax.xlane.f32.xlu0 %v568
          %v570 = vpop.xlane.xlu0 %569
          %vm571 = vcmp.ge.f32.partialorder %v566, %v570
          %vm572 = vcmp.ge.f32.partialorder %v567, %v570
          %v573 = vsel %vm571, %v485, 1073741824
          %v574 = vsel %vm572, %v486, 1073741824
          %vm575 = vcmp.lt.s32.totalorder %v573, %v574
          %v576 = vsel %vm575, %v573, %v574
          %v577 = vand.u32 %v576, 65535
          %v578 = vshra.s32 %v576, 16
          %v579 = vcvt.s32.f32 %v577
          %v580 = vcvt.s32.f32 %v578
          %581 = vmin.xlane.f32.xlu0 %v580
          %v582 = vpop.xlane.xlu0 %581
          %vm583 = vcmp.eq.f32.partialorder %v580, %v582
          %v584 = vsel %vm583, %v579, inf
          %585 = vmin.xlane.f32.xlu0 %v584
          %v586 = vpop.xlane.xlu0 %585
          %v587 = vcvt.f32.s32 %v586
          %v588 = vcvt.f32.s32 %v582
          %v589 = vshll.u32 %v588, 16
          %v590 = vadd.s32 %v589, %v587
          %vm591 = vcmp.eq.s32.totalorder %v485, %v590
          %vm592 = vcmp.eq.s32.totalorder %v486, %v590
          %v593 = vsel %vm591, -inf, %v566
          %v594 = vsel %vm592, -inf, %v567
          %v595 = vmax.f32 %v593, %v594
          %596 = vmax.xlane.f32.xlu0 %v595
          %v597 = vpop.xlane.xlu0 %596
          %vm598 = vcmp.ge.f32.partialorder %v593, %v597
          %vm599 = vcmp.ge.f32.partialorder %v594, %v597
          %v600 = vsel %vm598, %v485, 1073741824
          %v601 = vsel %vm599, %v486, 1073741824
          %vm602 = vcmp.lt.s32.totalorder %v600, %v601
          %v603 = vsel %vm602, %v600, %v601
          %v604 = vand.u32 %v603, 65535
          %v605 = vshra.s32 %v603, 16
          %v606 = vcvt.s32.f32 %v604
          %v607 = vcvt.s32.f32 %v605
          %608 = vmin.xlane.f32.xlu0 %v607
          %v609 = vpop.xlane.xlu0 %608
          %vm610 = vcmp.eq.f32.partialorder %v607, %v609
          %v611 = vsel %vm610, %v606, inf
          %612 = vmin.xlane.f32.xlu0 %v611
          %v613 = vpop.xlane.xlu0 %612
          %v614 = vcvt.f32.s32 %v613
          %v615 = vcvt.f32.s32 %v609
          %v616 = vshll.u32 %v615, 16
          %v617 = vadd.s32 %v616, %v614
          %vm618 = vcmp.eq.s32.totalorder %v485, %v617
          %vm619 = vcmp.eq.s32.totalorder %v486, %v617
          %v620 = vsel %vm618, -inf, %v593
          %v621 = vsel %vm619, -inf, %v594
          %v622 = vmax.f32 %v620, %v621
          %623 = vmax.xlane.f32.xlu0 %v622
          %v624 = vpop.xlane.xlu0 %623
          %vm625 = vcmp.ge.f32.partialorder %v620, %v624
          %vm626 = vcmp.ge.f32.partialorder %v621, %v624
          %v627 = vsel %vm625, %v485, 1073741824
          %v628 = vsel %vm626, %v486, 1073741824
          %vm629 = vcmp.lt.s32.totalorder %v627, %v628
          %v630 = vsel %vm629, %v627, %v628
          %v631 = vand.u32 %v630, 65535
          %v632 = vshra.s32 %v630, 16
          %v633 = vcvt.s32.f32 %v631
          %v634 = vcvt.s32.f32 %v632
          %635 = vmin.xlane.f32.xlu0 %v634
          %v636 = vpop.xlane.xlu0 %635
          %vm637 = vcmp.eq.f32.partialorder %v634, %v636
          %v638 = vsel %vm637, %v633, inf
          %639 = vmin.xlane.f32.xlu0 %v638
          %v640 = vpop.xlane.xlu0 %639
          %v641 = vcvt.f32.s32 %v640
          %v642 = vcvt.f32.s32 %v636
          %v643 = vshll.u32 %v642, 16
          %v644 = vadd.s32 %v643, %v641
          %v645 = vld [vmem:[%s315] sm:$0xff]
          %v646 = vld [vmem:[%s319] sm:$0xff]
          %vm647 = vcmask 31744
          %v648 = vsel %vm647, %v645, %v499
          %vm649 = vcmask 39936
          %v650 = vsel %vm649, %v648, %v570
          %vm651 = vcmask 48128
          %v652 = vsel %vm651, %v650, %v597
          %vm653 = vcmask 56320
          %v654 = vsel %vm653, %v652, %v624
          %v655 = vsel %vm647, %v646, %v563
          %v656 = vsel %vm649, %v655, %v590
          %v657 = vsel %vm651, %v656, %v617
          %v658 = vsel %vm653, %v657, %v644
          %vm659 = vcmask 64512
          %v660 = vsel %vm659, %v654, -inf
          %661 = vmax.xlane.f32.xlu0 %v660
          %v662 = vpop.xlane.xlu0 %661
          %vm663 = vcmp.ge.f32.partialorder %v654, %v662
          %v664 = vsel %vm663, %v481, 1073741824
          %v665 = vsel %vm659, %v664, 2147483647
          %v666 = vand.u32 %v665, 65535
          %v667 = vshra.s32 %v665, 16
          %v668 = vcvt.s32.f32 %v666
          %v669 = vcvt.s32.f32 %v667
          %670 = vmin.xlane.f32.xlu0 %v669
          %v671 = vpop.xlane.xlu0 %670
          %vm672 = vcmp.eq.f32.partialorder %v669, %v671
          %v673 = vsel %vm672, %v668, inf
          %674 = vmin.xlane.f32.xlu0 %v673
          %v675 = vpop.xlane.xlu0 %674
          %v676 = vcvt.f32.s32 %v675
          %v677 = vcvt.f32.s32 %v671
          %v678 = vshll.u32 %v677, 16
          %v679 = vadd.s32 %v678, %v676
          %vm680 = vcmp.eq.s32.totalorder %v481, %v679
          %v681 = vsel %vm680, %v658, 0
          %v682 = vsel %vm659, %v681, 0
          %v683 = vand.u32 %v682, 65535
          %v684 = vshrl.u32 %v682, 16
          %v685 = vcvt.s32.f32 %v683
          %v686 = vcvt.s32.f32 %v684
          %687 = vadd.xlane.f32.xlu0 %v685
          %v688 = vpop.xlane.xlu0 %687
          %689 = vadd.xlane.f32.xlu0 %v686
          %v690 = vpop.xlane.xlu0 %689
          %v691 = vcvt.f32.s32 %v688
          %v692 = vcvt.f32.s32 %v690
          %v693 = vshll.u32 %v692, 16
          %v694 = vadd.s32 %v693, %v691
          %v695 = vsel %vm680, -inf, %v654
          %v696 = vsel %vm659, %v695, -inf
          %697 = vmax.xlane.f32.xlu0 %v696
          %v698 = vpop.xlane.xlu0 %697
          %vm699 = vcmp.ge.f32.partialorder %v695, %v698
          %v700 = vsel %vm699, %v481, 1073741824
          %v701 = vsel %vm659, %v700, 2147483647
          %v702 = vand.u32 %v701, 65535
          %v703 = vshra.s32 %v701, 16
          %v704 = vcvt.s32.f32 %v702
          %v705 = vcvt.s32.f32 %v703
          %706 = vmin.xlane.f32.xlu0 %v705
          %v707 = vpop.xlane.xlu0 %706
          %vm708 = vcmp.eq.f32.partialorder %v705, %v707
          %v709 = vsel %vm708, %v704, inf
          %710 = vmin.xlane.f32.xlu0 %v709
          %v711 = vpop.xlane.xlu0 %710
          %v712 = vcvt.f32.s32 %v711
          %v713 = vcvt.f32.s32 %v707
          %v714 = vshll.u32 %v713, 16
          %v715 = vadd.s32 %v714, %v712
          %vm716 = vcmp.eq.s32.totalorder %v481, %v715
          %v717 = vsel %vm716, %v658, 0
          %v718 = vsel %vm659, %v717, 0
          %v719 = vand.u32 %v718, 65535
          %v720 = vshrl.u32 %v718, 16
          %v721 = vcvt.s32.f32 %v719
          %v722 = vcvt.s32.f32 %v720
          %723 = vadd.xlane.f32.xlu0 %v721
          %v724 = vpop.xlane.xlu0 %723
          %725 = vadd.xlane.f32.xlu0 %v722
          %v726 = vpop.xlane.xlu0 %725
          %v727 = vcvt.f32.s32 %v724
          %v728 = vcvt.f32.s32 %v726
          %v729 = vshll.u32 %v728, 16
          %v730 = vadd.s32 %v729, %v727
          %v731 = vsel %vm716, -inf, %v695
          %v732 = vsel %vm659, %v731, -inf
          %733 = vmax.xlane.f32.xlu0 %v732
          %v734 = vpop.xlane.xlu0 %733
          %vm735 = vcmp.ge.f32.partialorder %v731, %v734
          %v736 = vsel %vm735, %v481, 1073741824
          %v737 = vsel %vm659, %v736, 2147483647
          %v738 = vand.u32 %v737, 65535
          %v739 = vshra.s32 %v737, 16
          %v740 = vcvt.s32.f32 %v738
          %v741 = vcvt.s32.f32 %v739
          %742 = vmin.xlane.f32.xlu0 %v741
          %v743 = vpop.xlane.xlu0 %742
          %vm744 = vcmp.eq.f32.partialorder %v741, %v743
          %v745 = vsel %vm744, %v740, inf
          %746 = vmin.xlane.f32.xlu0 %v745
          %v747 = vpop.xlane.xlu0 %746
          %v748 = vcvt.f32.s32 %v747
          %v749 = vcvt.f32.s32 %v743
          %v750 = vshll.u32 %v749, 16
          %v751 = vadd.s32 %v750, %v748
          %vm752 = vcmp.eq.s32.totalorder %v481, %v751
          %v753 = vsel %vm752, %v658, 0
          %v754 = vsel %vm659, %v753, 0
          %v755 = vand.u32 %v754, 65535
          %v756 = vshrl.u32 %v754, 16
          %v757 = vcvt.s32.f32 %v755
          %v758 = vcvt.s32.f32 %v756
          %759 = vadd.xlane.f32.xlu0 %v757
          %v760 = vpop.xlane.xlu0 %759
          %761 = vadd.xlane.f32.xlu0 %v758
          %v762 = vpop.xlane.xlu0 %761
          %v763 = vcvt.f32.s32 %v760
          %v764 = vcvt.f32.s32 %v762
          %v765 = vshll.u32 %v764, 16
          %v766 = vadd.s32 %v765, %v763
          %v767 = vsel %vm752, -inf, %v731
          %v768 = vsel %vm659, %v767, -inf
          %769 = vmax.xlane.f32.xlu0 %v768
          %v770 = vpop.xlane.xlu0 %769
          %vm771 = vcmp.ge.f32.partialorder %v767, %v770
          %v772 = vsel %vm771, %v481, 1073741824
          %v773 = vsel %vm659, %v772, 2147483647
          %v774 = vand.u32 %v773, 65535
          %v775 = vshra.s32 %v773, 16
          %v776 = vcvt.s32.f32 %v774
          %v777 = vcvt.s32.f32 %v775
          %778 = vmin.xlane.f32.xlu0 %v777
          %v779 = vpop.xlane.xlu0 %778
          %vm780 = vcmp.eq.f32.partialorder %v777, %v779
          %v781 = vsel %vm780, %v776, inf
          %782 = vmin.xlane.f32.xlu0 %v781
          %v783 = vpop.xlane.xlu0 %782
          %v784 = vcvt.f32.s32 %v783
          %v785 = vcvt.f32.s32 %v779
          %v786 = vshll.u32 %v785, 16
          %v787 = vadd.s32 %v786, %v784
          %vm788 = vcmp.eq.s32.totalorder %v481, %v787
          %v789 = vsel %vm788, %v658, 0
          %v790 = vsel %vm659, %v789, 0
          %v791 = vand.u32 %v790, 65535
          %v792 = vshrl.u32 %v790, 16
          %v793 = vcvt.s32.f32 %v791
          %v794 = vcvt.s32.f32 %v792
          %795 = vadd.xlane.f32.xlu0 %v793
          %v796 = vpop.xlane.xlu0 %795
          %797 = vadd.xlane.f32.xlu0 %v794
          %v798 = vpop.xlane.xlu0 %797
          %v799 = vcvt.f32.s32 %v796
          %v800 = vcvt.f32.s32 %v798
          %v801 = vshll.u32 %v800, 16
          %v802 = vadd.s32 %v801, %v799
          %v803 = vsel %vm522, %v662, %v698
          %vm804 = vcmask 15360
          %v805 = vsel %vm804, %v803, %v734
          %vm806 = vcmask 23552
          %v807 = vsel %vm806, %v805, %v770
          %v808 = vsel %vm647, %v807, -inf
          %809 = vst [vmem:[%s315] sm:$0xff] %v808
          %v810 = vsel %vm522, %v694, %v730
          %v811 = vsel %vm804, %v810, %v766
          %v812 = vsel %vm806, %v811, %v802
          %v813 = vsel %vm647, %v812, 0
          %814 = vst [vmem:[%s319] sm:$0xff] %v813
        $region48: #{_decode.1} parent=35 // pred_fallthru
          _
        %p815 = scmp.eq.s32.totalorder %s25, 3
        // Predicated region
        $region49: #{_decode.1} parent=35 // pred_check
          %p816 = pneg %p815
        $region50: #{_decode.1} parent=35 // pred_check_branch
          %818 = sbr.rel (%p816) target = $region52
        $region51: #{_decode.1} parent=35 // pred_region
          %v819 = vld [vmem:[#allocation2] sm:$0xff]
          %v820 = vld [vmem:[#allocation3] sm:$0xff]
          %v821 = vlog2.pop %v820
          %v822 = vmul.f32 %v821, 0.6931472
          %v823 = vadd.f32 %v819, %v822
          %v824 = vld [vmem:[%s315] sm:$0xff]
          %826 = vset.pattern.permute.xlu0 0
          %827 = vperm.xlu0 %826, %v823
          %v828 = vpop.permute.xlu0 %827
          %v830 = vsub.f32 %v824, %v828
          %831 = vst [vmem:[%s315] sm:$0xff] %v830
        $region52: #{_decode.1} parent=35 // pred_fallthru
          _
        %p832 = scmp.lt.s32.totalorder %s24, 0
        %s833 = scalar_select %p832, %s24, 0
        %s834 = smul.addr %s833, 8
        %s835 = scalar_lea.vmem %s4, %s834
        %p836 = scmp.lt.s32.totalorder %s24, 0
        %s837 = scalar_select %p836, %s24, 0
        %s838 = smul.addr %s837, 8
        %s839 = scalar_lea.vmem %s5, %s838
        // Predicated region
        $region53: #{_decode.1} parent=35 // pred_check
          %p840 = pneg %p154
        $region54: #{_decode.1} parent=35 // pred_check_branch
          %842 = sbr.rel (%p840) target = $region56
        $region55: #{_decode.1} parent=35 // pred_region
          _
        $region56: #{_decode.1} parent=35 // pred_fallthru
          _
        // Predicated region
        $region57: #{_decode.1} parent=35 // pred_check
          %p843 = pneg %p180
        $region58: #{_decode.1} parent=35 // pred_check_branch
          %845 = sbr.rel (%p843) target = $region60
        $region59: #{_decode.1} parent=35 // pred_region
          _
        $region60: #{_decode.1} parent=35 // pred_fallthru
          _
        // Predicated region
        $region61: #{_decode.1} parent=35 // pred_check
          %p846 = pneg %p154
        $region62: #{_decode.1} parent=35 // pred_check_branch
          %848 = sbr.rel (%p846) target = $region64
        $region63: #{_decode.1} parent=35 // pred_region
          %p849 = scmp.lt.s32.totalorder %s24, 0
          %s850 = scalar_select %p849, %s24, 0
          %s851 = smul.addr %s850, 8
          %s852 = scalar_lea.vmem %s4, %s851
        $region64: #{_decode.1} parent=35 // pred_fallthru
          _
        // Predicated region
        $region65: #{_decode.1} parent=35 // pred_check
          %p853 = pneg %p180
        $region66: #{_decode.1} parent=35 // pred_check_branch
          %855 = sbr.rel (%p853) target = $region68
        $region67: #{_decode.1} parent=35 // pred_region
          %p856 = scmp.lt.s32.totalorder %s24, 0
          %s857 = scalar_select %p856, %s24, 0
          %s858 = smul.addr %s857, 8
          %s859 = scalar_lea.vmem %s5, %s858
        $region68: #{_decode.1} parent=35 // pred_fallthru
          _
      $region36: #{_decode.1} parent=5 // pred_fallthru
        _
      %p860 = scmp.le.s32.totalorder 2, %s15
      // Predicated region
      $region69: #{_decode.1} parent=5 // pred_check
        %p861 = pneg %p860
      $region70: #{_decode.1} parent=5 // pred_check_branch
        %863 = sbr.rel (%p861) target = $region72
      $region71: #{_decode.1} parent=5 // pred_region
        %s864 = ssub.s32 %s15, 2
      $region72: #{_decode.1} parent=5 // pred_fallthru
        _
    $region6: #{_decode.1} parent=1 // loop_footer
      %s19 = sadd.s32 1, %s15
    $region7: #{_decode.1} parent=1 // loop_footer_branch
      %14 = sbr.rel target = $region3
    $region8: #{_decode.1} parent=1 // loop_exit
      _
    %865 = vsyncpa [#allocation5], 1
    %s866 = scalar_lea.sflag [#allocation5], 1
    %867 = vsyncpa %s866, 1

// kernel: div.26
$region0: #{div.26}
  #allocation0 [shape = 's32[1]{0}', space=sflag, size = 0x4, scoped, tag = 'scoped memory for div.26']
  %s0 = inlined_call_operand.vmem [shape: f32[2,4], index: 0, kind: input, shape index: {}]
  %s1 = inlined_call_operand.vmem [shape: f32[2,4], index: 1, kind: input, shape index: {}]
  %s2 = inlined_call_operand.vmem [shape: f32[2,4], index: 2, kind: output, shape index: {}]
  %v3 = vld [vmem:[%s0] sm:$0xf]
  %v4 = vld [vmem:[%s1] sm:$0xf]
  %5 = xla_tuple %v3, %v4
  %6 = xla_tuple %5
  %v7 = vrcp.pop %v4
  %v8 = vmul.f32 %v3, %v7
  %9 = xla_tuple %v8
  %10 = vst [vmem:[%s2] sm:$0xf] %v8

// kernel: body.8
$region0: #{body.8}
  #allocation0 [shape = 'u32[]', space=smem, size = 0x4, offset = 0x4, fixed_abs, tag = 'smem constant byte address 0x4 - core index']
  #allocation1 [shape = 'u32[144,128]{1,0:T(1,128)}', space=vmem, size = 0x12000, scoped, tag = 'internal scratch']
  #allocation2 [shape = 'f32[8,1]{1,0:T(8,128)}', space=vmem, size = 0x1000, scoped, tag = 'scratch operand']
  #allocation3 [shape = 'f32[8,1]{1,0:T(8,128)}', space=vmem, size = 0x1000, scoped, tag = 'scratch operand']
  %s0 = inlined_call_operand.vmem [shape: bf16[8,128], index: 0, kind: input, shape index: {}]
  %s1 = inlined_call_operand.vmem [shape: bf16[128,1024], index: 1, kind: input, shape index: {}]
  %s2 = inlined_call_operand.vmem [shape: f32[1,1024], index: 2, kind: input, shape index: {}]
  %s3 = inlined_call_operand.vmem [shape: s32[8,1], index: 3, kind: input, shape index: {}]
  %s4 = inlined_call_operand.vmem [shape: f32[8,128], index: 4, kind: output, shape index: {0}]
  %s5 = inlined_call_operand.vmem [shape: s32[8,128], index: 5, kind: output, shape index: {1}]
  %6 = xla_tuple %s4, %s5
  %s7 = sld [smem:[#allocation0]]
  $region107: #{body.8} parent=0
    _
  %s9 = ssub.s32 1, %s7
  %s10 = scalar_select 0, %s9, %s7
  $region1: #{body.8} parent=0
    #allocation4 [shape = 'u8[131072]{0}', space=vmem, size = 0x20000, scoped, tag = 'input window, operand 1']
    loop: start=0, step=1, limit=6
    $region2: #{body.8} parent=1 // loop_pre_header
      _
    $region3: #{body.8} parent=1 // loop_header
      %s12 = sphi 0, %s16
      %p13 = scmp.ge.s32.totalorder %s12, 6
      %s19 = sphi 0, %s31
      %s20 = sphi 0, %s27
      %s21 = sphi 0, %s19
      %s22 = sphi 0, %s20
      %s23 = sphi 0, %s21
      %s24 = sphi 0, %s22
      %s34 = sphi 0, %s36
      %s37 = sphi 0, %s34
      %s38 = sphi 0, %s37
      %s54 = sphi 0, %s38
      %s60 = sphi 0, %s62
      %s63 = sphi 0, %s60
      %s64 = sphi 0, %s63
      %s80 = sphi 0, %s64
      %s86 = sphi 0, %s88
      %s89 = sphi 0, %s86
      %s90 = sphi 0, %s89
      %s106 = sphi 0, %s90
      %s112 = sphi 0, %s114
      %s115 = sphi 0, %s112
      %s116 = sphi 0, %s115
      %s132 = sphi 0, %s116
      %s138 = sphi 0, %s140
      %s141 = sphi 0, %s138
      %s142 = sphi 0, %s141
      %s158 = sphi 0, %s142
      %s164 = sphi 0, %s166
      %s167 = sphi 0, %s164
      %s168 = sphi 0, %s167
      %s184 = sphi 0, %s168
    $region4: #{body.8} parent=1 // loop_header_branch
      %15 = sbr.rel (%p13) target = $region8
    $region5: #{body.8} parent=1 // loop_body
      %s17 = ssub.s32 %s12, 1
      %s18 = ssub.s32 %s12, 2
      %s25 = sadd.s32 1, %s20
      %p26 = scmp.ge.s32.totalorder %s25, 4
      %s27 = scalar_select %p26, 0, %s25
      %s28 = sadd.s32 1, %s19
      %s29 = scalar_select %p26, %s28, %s19
      %p30 = scmp.ge.s32.totalorder %s29, 1
      %s31 = scalar_select %p30, 0, %s29
      %s32 = ssub.s32 %s19, %s31
      %p33 = scmp.eq.s32.totalorder %s32, 0
      %s35 = sadd.s32 %s34, 1
      %s36 = scalar_select %p33, %s34, %s35
      %p39 = pneg %p33
      %p40 = scmp.eq.s32.totalorder %s12, 3
      %p41 = por %p39, %p40
      %p42 = scmp.ne.s32.totalorder %s34, %s37
      %p43 = scmp.eq.s32.totalorder %s12, 0
      %p44 = por %p42, %p43
      %p45 = scmp.ne.s32.totalorder %s34, %s37
      %p46 = scmp.eq.s32.totalorder %s17, 3
      %p47 = por %p45, %p46
      %p48 = scmp.ne.s32.totalorder %s37, %s38
      %p49 = scmp.eq.s32.totalorder %s17, 0
      %p50 = por %p48, %p49
      %p51 = scmp.ne.s32.totalorder %s37, %s38
      %p52 = scmp.eq.s32.totalorder %s18, 3
      %p53 = por %p51, %p52
      %p55 = scmp.ne.s32.totalorder %s38, %s54
      %p56 = scmp.eq.s32.totalorder %s18, 0
      %p57 = por %p55, %p56
      %s58 = ssub.s32 %s20, %s27
      %p59 = scmp.eq.s32.totalorder %s58, 0
      %s61 = sadd.s32 %s60, 1
      %s62 = scalar_select %p59, %s60, %s61
      %p65 = pneg %p59
      %p66 = scmp.eq.s32.totalorder %s12, 3
      %p67 = por %p65, %p66
      %p68 = scmp.ne.s32.totalorder %s60, %s63
      %p69 = scmp.eq.s32.totalorder %s12, 0
      %p70 = por %p68, %p69
      %p71 = scmp.ne.s32.totalorder %s60, %s63
      %p72 = scmp.eq.s32.totalorder %s17, 3
      %p73 = por %p71, %p72
      %p74 = scmp.ne.s32.totalorder %s63, %s64
      %p75 = scmp.eq.s32.totalorder %s17, 0
      %p76 = por %p74, %p75
      %p77 = scmp.ne.s32.totalorder %s63, %s64
      %p78 = scmp.eq.s32.totalorder %s18, 3
      %p79 = por %p77, %p78
      %p81 = scmp.ne.s32.totalorder %s64, %s80
      %p82 = scmp.eq.s32.totalorder %s18, 0
      %p83 = por %p81, %p82
      %s84 = ssub.s32 %s20, %s27
      %p85 = scmp.eq.s32.totalorder %s84, 0
      %s87 = sadd.s32 %s86, 1
      %s88 = scalar_select %p85, %s86, %s87
      %p91 = pneg %p85
      %p92 = scmp.eq.s32.totalorder %s12, 3
      %p93 = por %p91, %p92
      %p94 = scmp.ne.s32.totalorder %s86, %s89
      %p95 = scmp.eq.s32.totalorder %s12, 0
      %p96 = por %p94, %p95
      %p97 = scmp.ne.s32.totalorder %s86, %s89
      %p98 = scmp.eq.s32.totalorder %s17, 3
      %p99 = por %p97, %p98
      %p100 = scmp.ne.s32.totalorder %s89, %s90
      %p101 = scmp.eq.s32.totalorder %s17, 0
      %p102 = por %p100, %p101
      %p103 = scmp.ne.s32.totalorder %s89, %s90
      %p104 = scmp.eq.s32.totalorder %s18, 3
      %p105 = por %p103, %p104
      %p107 = scmp.ne.s32.totalorder %s90, %s106
      %p108 = scmp.eq.s32.totalorder %s18, 0
      %p109 = por %p107, %p108
      %s110 = ssub.s32 %s19, %s31
      %p111 = scmp.eq.s32.totalorder %s110, 0
      %s113 = sadd.s32 %s112, 1
      %s114 = scalar_select %p111, %s112, %s113
      %p117 = pneg %p111
      %p118 = scmp.eq.s32.totalorder %s12, 3
      %p119 = por %p117, %p118
      %p120 = scmp.ne.s32.totalorder %s112, %s115
      %p121 = scmp.eq.s32.totalorder %s12, 0
      %p122 = por %p120, %p121
      %p123 = scmp.ne.s32.totalorder %s112, %s115
      %p124 = scmp.eq.s32.totalorder %s17, 3
      %p125 = por %p123, %p124
      %p126 = scmp.ne.s32.totalorder %s115, %s116
      %p127 = scmp.eq.s32.totalorder %s17, 0
      %p128 = por %p126, %p127
      %p129 = scmp.ne.s32.totalorder %s115, %s116
      %p130 = scmp.eq.s32.totalorder %s18, 3
      %p131 = por %p129, %p130
      %p133 = scmp.ne.s32.totalorder %s116, %s132
      %p134 = scmp.eq.s32.totalorder %s18, 0
      %p135 = por %p133, %p134
      %s136 = ssub.s32 %s19, %s31
      %p137 = scmp.eq.s32.totalorder %s136, 0
      %s139 = sadd.s32 %s138, 1
      %s140 = scalar_select %p137, %s138, %s139
      %p143 = pneg %p137
      %p144 = scmp.eq.s32.totalorder %s12, 3
      %p145 = por %p143, %p144
      %p146 = scmp.ne.s32.totalorder %s138, %s141
      %p147 = scmp.eq.s32.totalorder %s12, 0
      %p148 = por %p146, %p147
      %p149 = scmp.ne.s32.totalorder %s138, %s141
      %p150 = scmp.eq.s32.totalorder %s17, 3
      %p151 = por %p149, %p150
      %p152 = scmp.ne.s32.totalorder %s141, %s142
      %p153 = scmp.eq.s32.totalorder %s17, 0
      %p154 = por %p152, %p153
      %p155 = scmp.ne.s32.totalorder %s141, %s142
      %p156 = scmp.eq.s32.totalorder %s18, 3
      %p157 = por %p155, %p156
      %p159 = scmp.ne.s32.totalorder %s142, %s158
      %p160 = scmp.eq.s32.totalorder %s18, 0
      %p161 = por %p159, %p160
      %s162 = ssub.s32 %s19, %s31
      %p163 = scmp.eq.s32.totalorder %s162, 0
      %s165 = sadd.s32 %s164, 1
      %s166 = scalar_select %p163, %s164, %s165
      %p169 = pneg %p163
      %p170 = scmp.eq.s32.totalorder %s12, 3
      %p171 = por %p169, %p170
      %p172 = scmp.ne.s32.totalorder %s164, %s167
      %p173 = scmp.eq.s32.totalorder %s12, 0
      %p174 = por %p172, %p173
      %p175 = scmp.ne.s32.totalorder %s164, %s167
      %p176 = scmp.eq.s32.totalorder %s17, 3
      %p177 = por %p175, %p176
      %p178 = scmp.ne.s32.totalorder %s167, %s168
      %p179 = scmp.eq.s32.totalorder %s17, 0
      %p180 = por %p178, %p179
      %p181 = scmp.ne.s32.totalorder %s167, %s168
      %p182 = scmp.eq.s32.totalorder %s18, 3
      %p183 = por %p181, %p182
      %p185 = scmp.ne.s32.totalorder %s168, %s184
      %p186 = scmp.eq.s32.totalorder %s18, 0
      %p187 = por %p185, %p186
      %p188 = scmp.le.s32.totalorder 1, %s12
      %p189 = scmp.lt.s32.totalorder %s12, 5
      %p190 = pnand %p188, %p189
      %p191 = pneg %p190
      // Predicated region
      $region9: #{body.8} parent=5 // pred_check
        _
      $region10: #{body.8} parent=5 // pred_check_branch
        %193 = sbr.rel (%p190) target = $region12
      $region11: #{body.8} parent=5 // pred_region
        %s194 = ssub.s32 %s12, 1
        // Predicated region
        $region13: #{body.8} parent=11 // pred_check
          %p195 = pneg %p50
        $region14: #{body.8} parent=11 // pred_check_branch
          %197 = sbr.rel (%p195) target = $region16
        $region15: #{body.8} parent=11 // pred_region
          %p198 = scmp.lt.s32.totalorder %s21, 0
          %s199 = scalar_select %p198, %s21, 0
          %s200 = smul.addr %s199, 4
          %s201 = scalar_lea.vmem %s0, %s200
        $region16: #{body.8} parent=11 // pred_fallthru
          _
        // Predicated region
        $region17: #{body.8} parent=11 // pred_check
          %p202 = pneg %p128
        $region18: #{body.8} parent=11 // pred_check_branch
          %204 = sbr.rel (%p202) target = $region20
        $region19: #{body.8} parent=11 // pred_region
          %p205 = scmp.lt.s32.totalorder %s21, 0
          %s206 = scalar_select %p205, %s21, 0
          %s207 = smul.addr %s206, 8
          %s208 = scalar_lea.vmem %s3, %s207
        $region20: #{body.8} parent=11 // pred_fallthru
          _
      $region12: #{body.8} parent=5 // pred_fallthru
        _
      %p209 = scmp.lt.s32.totalorder %s12, 4
      // Predicated region
      $region21: #{body.8} parent=5 // pred_check
        %p210 = pneg %p209
      $region22: #{body.8} parent=5 // pred_check_branch
        %212 = sbr.rel (%p210) target = $region24
      $region23: #{body.8} parent=5 // pred_region
        // Predicated region
        $region25: #{body.8} parent=23 // pred_check
          %p213 = pneg %p70
        $region26: #{body.8} parent=23 // pred_check_branch
          %215 = sbr.rel (%p213) target = $region28
        $region27: #{body.8} parent=23 // pred_region
          %s216 = sand.u32 %s60, 1
          %s217 = sand.u32 %s60, 1
          %s218 = smul.addr %s217, 128
          %s219 = scalar_lea.vmem [#allocation4], %s218
          %s220 = smul.u32 2, %s20
          %s221 = smul.addr %s220, 4
          %s222 = scalar_lea.vmem %s1, %s221
          // Predicated region
          $region29: #{body.8} parent=27 // pred_check
            _
          $region30: #{body.8} parent=27 // pred_check_branch
            %224 = sbr.rel (0) target = $region32
          $region31: #{body.8} parent=27 // pred_region
            // Predicated region
            $region33: #{body.8} parent=31 // pred_check
              _
            $region34: #{body.8} parent=31 // pred_check_branch
              %226 = sbr.rel (0) target = $region36
            $region35: #{body.8} parent=31 // pred_region
              // Predicated region
              $region48: #{body.8} parent=35 // pred_check
                _
              $region49: #{body.8} parent=35 // pred_check_branch
                %272 = sbr.rel (0) target = $region51
              $region50: #{body.8} parent=35 // pred_region
                loop: start=0, step=1, limit=1
                $region52: #{body.8} parent=50 // loop_pre_header
                  _
                $region53: #{body.8} parent=50 // loop_header
                  %s274 = sphi 0, %s278
                  %p275 = scmp.ge.s32.totalorder %s274, 1
                  %s279 = sphi %s222, %s222
                  %s280 = sphi %s219, %s219
                $region54: #{body.8} parent=50 // loop_header_branch
                  %277 = sbr.rel (%p275) target = $region58
                $region55: #{body.8} parent=50 // loop_body
                  %v281 = vld [vmem:[%s279] sm:$0xff]
                  %282 = vst [vmem:[%s280] sm:$0xff] %v281
                  %v283 = vld [vmem:[%s279 + $0x20] sm:$0xff]
                  %284 = vst [vmem:[%s280 + $0x8] sm:$0xff] %v283
                  %v285 = vld [vmem:[%s279 + $0x40] sm:$0xff]
                  %286 = vst [vmem:[%s280 + $0x10] sm:$0xff] %v285
                  %v287 = vld [vmem:[%s279 + $0x60] sm:$0xff]
                  %288 = vst [vmem:[%s280 + $0x18] sm:$0xff] %v287
                  %v289 = vld [vmem:[%s279 + $0x80] sm:$0xff]
                  %290 = vst [vmem:[%s280 + $0x20] sm:$0xff] %v289
                  %v291 = vld [vmem:[%s279 + $0xa0] sm:$0xff]
                  %292 = vst [vmem:[%s280 + $0x28] sm:$0xff] %v291
                  %v293 = vld [vmem:[%s279 + $0xc0] sm:$0xff]
                  %294 = vst [vmem:[%s280 + $0x30] sm:$0xff] %v293
                  %v295 = vld [vmem:[%s279 + $0xe0] sm:$0xff]
                  %296 = vst [vmem:[%s280 + $0x38] sm:$0xff] %v295
                  %v297 = vld [vmem:[%s279 + $0x100] sm:$0xff]
                  %298 = vst [vmem:[%s280 + $0x40] sm:$0xff] %v297
                  %v299 = vld [vmem:[%s279 + $0x120] sm:$0xff]
                  %300 = vst [vmem:[%s280 + $0x48] sm:$0xff] %v299
                  %v301 = vld [vmem:[%s279 + $0x140] sm:$0xff]
                  %302 = vst [vmem:[%s280 + $0x50] sm:$0xff] %v301
                  %v303 = vld [vmem:[%s279 + $0x160] sm:$0xff]
                  %304 = vst [vmem:[%s280 + $0x58] sm:$0xff] %v303
                  %v305 = vld [vmem:[%s279 + $0x180] sm:$0xff]
                  %306 = vst [vmem:[%s280 + $0x60] sm:$0xff] %v305
                  %v307 = vld [vmem:[%s279 + $0x1a0] sm:$0xff]
                  %308 = vst [vmem:[%s280 + $0x68] sm:$0xff] %v307
                  %v309 = vld [vmem:[%s279 + $0x1c0] sm:$0xff]
                  %310 = vst [vmem:[%s280 + $0x70] sm:$0xff] %v309
                  %v311 = vld [vmem:[%s279 + $0x1e0] sm:$0xff]
                  %312 = vst [vmem:[%s280 + $0x78] sm:$0xff] %v311
                $region56: #{body.8} parent=50 // loop_footer
                  %s278 = sadd.s32 1, %s274
                $region57: #{body.8} parent=50 // loop_footer_branch
                  %273 = sbr.rel target = $region53
                $region58: #{body.8} parent=50 // loop_exit
                  _
              $region51: #{body.8} parent=35 // pred_fallthru
                _
              // Predicated region
              $region59: #{body.8} parent=35 // pred_check
                _
              $region60: #{body.8} parent=35 // pred_check_branch
                %314 = sbr.rel target = $region62
              $region61: #{body.8} parent=35 // pred_region
                _
              $region62: #{body.8} parent=35 // pred_fallthru
                _
            $region36: #{body.8} parent=31 // pred_fallthru
              _
            // Predicated region
            $region37: #{body.8} parent=31 // pred_check
              _
            $region38: #{body.8} parent=31 // pred_check_branch
              %228 = sbr.rel target = $region40
            $region39: #{body.8} parent=31 // pred_region
              %s230 = ssub.s32 256, 1
              loop: start=0, step=1, limit=1
              $region41: #{body.8} parent=39 // loop_pre_header
                _
              $region42: #{body.8} parent=39 // loop_header
                %s232 = sphi 0, %s236
                %p233 = scmp.ge.s32.totalorder %s232, 1
                %s237 = sphi %s222, %s222
                %s238 = sphi %s219, %s219
              $region43: #{body.8} parent=39 // loop_header_branch
                %235 = sbr.rel (%p233) target = $region47
              $region44: #{body.8} parent=39 // loop_body
                %v239 = vld [vmem:[%s237] sm:%s230]
                %240 = vst [vmem:[%s238] sm:%s230] %v239
                %v241 = vld [vmem:[%s237 + $0x20] sm:%s230]
                %242 = vst [vmem:[%s238 + $0x8] sm:%s230] %v241
                %v243 = vld [vmem:[%s237 + $0x40] sm:%s230]
                %244 = vst [vmem:[%s238 + $0x10] sm:%s230] %v243
                %v245 = vld [vmem:[%s237 + $0x60] sm:%s230]
                %246 = vst [vmem:[%s238 + $0x18] sm:%s230] %v245
                %v247 = vld [vmem:[%s237 + $0x80] sm:%s230]
                %248 = vst [vmem:[%s238 + $0x20] sm:%s230] %v247
                %v249 = vld [vmem:[%s237 + $0xa0] sm:%s230]
                %250 = vst [vmem:[%s238 + $0x28] sm:%s230] %v249
                %v251 = vld [vmem:[%s237 + $0xc0] sm:%s230]
                %252 = vst [vmem:[%s238 + $0x30] sm:%s230] %v251
                %v253 = vld [vmem:[%s237 + $0xe0] sm:%s230]
                %254 = vst [vmem:[%s238 + $0x38] sm:%s230] %v253
                %v255 = vld [vmem:[%s237 + $0x100] sm:%s230]
                %256 = vst [vmem:[%s238 + $0x40] sm:%s230] %v255
                %v257 = vld [vmem:[%s237 + $0x120] sm:%s230]
                %258 = vst [vmem:[%s238 + $0x48] sm:%s230] %v257
                %v259 = vld [vmem:[%s237 + $0x140] sm:%s230]
                %260 = vst [vmem:[%s238 + $0x50] sm:%s230] %v259
                %v261 = vld [vmem:[%s237 + $0x160] sm:%s230]
                %262 = vst [vmem:[%s238 + $0x58] sm:%s230] %v261
                %v263 = vld [vmem:[%s237 + $0x180] sm:%s230]
                %264 = vst [vmem:[%s238 + $0x60] sm:%s230] %v263
                %v265 = vld [vmem:[%s237 + $0x1a0] sm:%s230]
                %266 = vst [vmem:[%s238 + $0x68] sm:%s230] %v265
                %v267 = vld [vmem:[%s237 + $0x1c0] sm:%s230]
                %268 = vst [vmem:[%s238 + $0x70] sm:%s230] %v267
                %v269 = vld [vmem:[%s237 + $0x1e0] sm:%s230]
                %270 = vst [vmem:[%s238 + $0x78] sm:%s230] %v269
              $region45: #{body.8} parent=39 // loop_footer
                %s236 = sadd.s32 1, %s232
              $region46: #{body.8} parent=39 // loop_footer_branch
                %231 = sbr.rel target = $region42
              $region47: #{body.8} parent=39 // loop_exit
                _
            $region40: #{body.8} parent=31 // pred_fallthru
              _
          $region32: #{body.8} parent=27 // pred_fallthru
            _
          %315 = vnop
        $region28: #{body.8} parent=23 // pred_fallthru
          _
        // Predicated region
        $region63: #{body.8} parent=23 // pred_check
          %p316 = pneg %p96
        $region64: #{body.8} parent=23 // pred_check_branch
          %318 = sbr.rel (%p316) target = $region66
        $region65: #{body.8} parent=23 // pred_region
          %s319 = smul.u32 2, %s20
          %p320 = scmp.lt.s32.totalorder %s319, 7
          %s321 = scalar_select %p320, %s319, 7
          %s322 = scalar_lea.vmem %s2, %s321
          %s323 = smul.u32 2, %s20
        $region66: #{body.8} parent=23 // pred_fallthru
          _
      $region24: #{body.8} parent=5 // pred_fallthru
        _
      %p324 = scmp.le.s32.totalorder 1, %s12
      %p325 = scmp.lt.s32.totalorder %s12, 5
      %p326 = pnand %p324, %p325
      %p327 = pneg %p326
      // Predicated region
      $region67: #{body.8} parent=5 // pred_check
        _
      $region68: #{body.8} parent=5 // pred_check_branch
        %329 = sbr.rel (%p326) target = $region70
      $region69: #{body.8} parent=5 // pred_region
        %s330 = ssub.s32 %s12, 1
        %s331 = sand.u32 %s63, 1
        %s332 = sand.u32 %s63, 1
        %s333 = smul.addr %s332, 128
        %s334 = scalar_lea.vmem [#allocation4], %s333
        // Predicated region
        $region71: #{body.8} parent=69 // pred_check
          %p335 = pneg %p76
        $region72: #{body.8} parent=69 // pred_check_branch
          %337 = sbr.rel (%p335) target = $region74
        $region73: #{body.8} parent=69 // pred_region
          _
        $region74: #{body.8} parent=69 // pred_fallthru
          _
        %p338 = scmp.lt.s32.totalorder %s21, 0
        %s339 = scalar_select %p338, %s21, 0
        %s340 = smul.addr %s339, 4
        %s341 = scalar_lea.vmem %s0, %s340
        %p342 = pneg %p50
        %p343 = pneg %p47
        %s344 = sand.u32 %s63, 1
        %s345 = sand.u32 %s63, 1
        %s346 = smul.addr %s345, 128
        %s347 = scalar_lea.vmem [#allocation4], %s346
        %p348 = pneg %p76
        %p349 = pneg %p73
        %s350 = smul.u32 2, %s22
        %p351 = scmp.lt.s32.totalorder %s350, 7
        %s352 = scalar_select %p351, %s350, 7
        %s353 = scalar_lea.vmem %s2, %s352
        %p354 = pneg %p102
        %p355 = pneg %p99
        %p356 = scmp.lt.s32.totalorder %s21, 0
        %s357 = scalar_select %p356, %s21, 0
        %s358 = smul.addr %s357, 8
        %s359 = scalar_lea.vmem %s3, %s358
        %p360 = pneg %p128
        %p361 = pneg %p125
        %p362 = pneg %p154
        %p363 = pneg %p151
        %p364 = scmp.lt.s32.totalorder %s21, 0
        %s365 = scalar_select %p364, %s21, 0
        %s366 = smul.addr %s365, 8
        %s367 = scalar_lea.vmem %s4, %s366
        %p368 = pneg %p180
        %p369 = pneg %p177
        %p370 = scmp.lt.s32.totalorder %s21, 0
        %s371 = scalar_select %p370, %s21, 0
        %s372 = smul.addr %s371, 8
        %s373 = scalar_lea.vmem %s5, %s372
        %p374 = scmp.lt.s32.totalorder %s21, 0
        %s375 = scalar_select %p374, %s21, 0
        %s376 = smul.addr %s375, 4
        %s377 = scalar_lea.vmem %s0, %s376
        %s378 = smul.u32 2, %s22
        %s379 = smul.u32 2, %s22
        %p380 = scmp.lt.s32.totalorder %s379, 7
        %s381 = scalar_select %p380, %s379, 7
        %s382 = scalar_lea.vmem %s2, %s381
        %s383 = smul.u32 2, %s22
        %p384 = scmp.lt.s32.totalorder %s21, 0
        %s385 = scalar_select %p384, %s21, 0
        %s386 = smul.addr %s385, 8
        %s387 = scalar_lea.vmem %s3, %s386
        %p388 = scmp.lt.s32.totalorder %s21, 0
        %s389 = scalar_select %p388, %s21, 0
        %s390 = smul.addr %s389, 8
        %s391 = scalar_lea.vmem %s4, %s390
        %p392 = scmp.lt.s32.totalorder %s21, 0
        %s393 = scalar_select %p392, %s21, 0
        %s394 = smul.addr %s393, 8
        %s395 = scalar_lea.vmem %s5, %s394
        %p397 = scmp.eq.s32.totalorder %s22, 0
        // Predicated region
        $region75: #{body.8} parent=69 // pred_check
          %p398 = pneg %p397
        $region76: #{body.8} parent=69 // pred_check_branch
          %400 = sbr.rel (%p398) target = $region78
        $region77: #{body.8} parent=69 // pred_region
          %vm401 = vcmask 7168
          %402 = vst.msk [vmem:[#allocation2] sm:$0xff] %vm401, -inf
          %403 = vst.msk [vmem:[#allocation3] sm:$0xff] %vm401, 0.0
          %404 = vst [vmem:[%s391] sm:$0xff] -inf
          %405 = vst [vmem:[%s395] sm:$0xff] 0
        $region78: #{body.8} parent=69 // pred_fallthru
          _
        %v406 = vld [vmem:[%s377] sm:$0xf]
        %v407 = vld [vmem:[%s334] sm:$0xff]
        %v408 = vld [vmem:[%s334 + $0x8] sm:$0xff]
        %v409 = vld [vmem:[%s334 + $0x10] sm:$0xff]
        %v410 = vld [vmem:[%s334 + $0x18] sm:$0xff]
        %v411 = vld [vmem:[%s334 + $0x20] sm:$0xff]
        %v412 = vld [vmem:[%s334 + $0x28] sm:$0xff]
        %v413 = vld [vmem:[%s334 + $0x30] sm:$0xff]
        %v414 = vld [vmem:[%s334 + $0x38] sm:$0xff]
        %v415 = vld [vmem:[%s334 + $0x40] sm:$0xff]
        %v416 = vld [vmem:[%s334 + $0x48] sm:$0xff]
        %v417 = vld [vmem:[%s334 + $0x50] sm:$0xff]
        %v418 = vld [vmem:[%s334 + $0x58] sm:$0xff]
        %v419 = vld [vmem:[%s334 + $0x60] sm:$0xff]
        %v420 = vld [vmem:[%s334 + $0x68] sm:$0xff]
        %v421 = vld [vmem:[%s334 + $0x70] sm:$0xff]
        %v422 = vld [vmem:[%s334 + $0x78] sm:$0xff]
        %v423 = vld [vmem:[%s382] sm:$0x3]
        %v425 = vlaneseq
        %v426 = vshrl.u32 %v425, 7
        %v427 = vsub.s32 0, %v426
        %v428 = vrot.slane %v423, %v427
        %v429 = vlaneseq
        %v430 = vshrl.u32 %v429, 7
        %v431 = vsub.s32 1, %v430
        %v432 = vrot.slane %v423, %v431
        %v451 = vunpack.c.l.b16 %v407
        %v452 = vunpack.c.h.b16 %v407
        %v453 = vunpack.c.l.b16 %v408
        %v454 = vunpack.c.h.b16 %v408
        %v455 = vunpack.c.l.b16 %v409
        %v456 = vunpack.c.h.b16 %v409
        %v457 = vunpack.c.l.b16 %v410
        %v458 = vunpack.c.h.b16 %v410
        %v459 = vunpack.c.l.b16 %v411
        %v460 = vunpack.c.h.b16 %v411
        %v461 = vunpack.c.l.b16 %v412
        %v462 = vunpack.c.h.b16 %v412
        %v463 = vunpack.c.l.b16 %v413
        %v464 = vunpack.c.h.b16 %v413
        %v465 = vunpack.c.l.b16 %v414
        %v466 = vunpack.c.h.b16 %v414
        %v467 = vunpack.c.l.b16 %v415
        %v468 = vunpack.c.h.b16 %v415
        %v469 = vunpack.c.l.b16 %v416
        %v470 = vunpack.c.h.b16 %v416
        %v471 = vunpack.c.l.b16 %v417
        %v472 = vunpack.c.h.b16 %v417
        %v473 = vunpack.c.l.b16 %v418
        %v474 = vunpack.c.h.b16 %v418
        %v475 = vunpack.c.l.b16 %v419
        %v476 = vunpack.c.h.b16 %v419
        %v477 = vunpack.c.l.b16 %v420
        %v478 = vunpack.c.h.b16 %v420
        %v479 = vunpack.c.l.b16 %v421
        %v480 = vunpack.c.h.b16 %v421
        %v481 = vunpack.c.l.b16 %v422
        %v482 = vunpack.c.h.b16 %v422
        %v483 = vpack.c.b16 %v453, %v451
        %v484 = vpack.c.b16 %v454, %v452
        %v485 = vpack.c.b16 %v457, %v455
        %v486 = vpack.c.b16 %v458, %v456
        %v487 = vpack.c.b16 %v461, %v459
        %v488 = vpack.c.b16 %v462, %v460
        %v489 = vpack.c.b16 %v465, %v463
        %v490 = vpack.c.b16 %v466, %v464
        %v491 = vpack.c.b16 %v469, %v467
        %v492 = vpack.c.b16 %v470, %v468
        %v493 = vpack.c.b16 %v473, %v471
        %v494 = vpack.c.b16 %v474, %v472
        %v495 = vpack.c.b16 %v477, %v475
        %v496 = vpack.c.b16 %v478, %v476
        %v497 = vpack.c.b16 %v481, %v479
        %v498 = vpack.c.b16 %v482, %v480
        %515 = vmatprep.subr.bf16.mxu0 %v498
        %516 = vmatpush1.bf16.msra.mxu0 %v497
        %517 = vmatprep.subr.bf16.mxu0 %v496
        %518 = vmatpush1.bf16.msra.mxu0 %v495
        %519 = vmatprep.subr.bf16.mxu0 %v494
        %520 = vmatpush1.bf16.msra.mxu0 %v493
        %521 = vmatprep.subr.bf16.mxu0 %v492
        %522 = vmatpush1.bf16.msra.mxu0 %v491
        %523 = vmatprep.subr.bf16.mxu0 %v490
        %524 = vmatpush1.bf16.msra.mxu0 %v489
        %525 = vmatprep.subr.bf16.mxu0 %v488
        %526 = vmatpush1.bf16.msra.mxu0 %v487
        %527 = vmatprep.subr.bf16.mxu0 %v486
        %528 = vmatpush1.bf16.msra.mxu0 %v485
        %529 = vmatprep.subr.bf16.mxu0 %v484
        %530 = vmatpush1.bf16.msra.mxu0 %v483
        %531 = vmatprep.subr.bf16.mxu0 0
        %532 = vmatpush2.bf16.msra.mxu0 0
        %533 = vmatprep.subr.bf16.mxu0 0
        %534 = vmatpush2.bf16.msra.mxu0 0
        %535 = vmatprep.subr.bf16.mxu0 0
        %536 = vmatpush2.bf16.msra.mxu0 0
        %537 = vmatprep.subr.bf16.mxu0 0
        %538 = vmatpush2.bf16.msra.mxu0 0
        %539 = vmatprep.subr.bf16.mxu0 0
        %540 = vmatpush2.bf16.msra.mxu0 0
        %541 = vmatprep.subr.bf16.mxu0 0
        %542 = vmatpush2.bf16.msra.mxu0 0
        %543 = vmatprep.subr.bf16.mxu0 0
        %544 = vmatpush2.bf16.msra.mxu0 0
        %545 = vmatprep.subr.bf16.mxu0 0
        %546 = vmatpush2.bf16.msra.mxu0 0
        %547 = vmatprep.mubr.bf16.mxu0 0
        %548 = vmatmul.mubr.bf16.gmra.mxu0 %v406
        %v549 = vpop.f32.mrf.mxu0
        %v550 = vadd.f32 %v428, %v549
        %v551 = vpop.f32.mrf.mxu0
        %v552 = vadd.f32 %v432, %v551
        %v553 = vpop.f32.mrf.mxu0
        %v554 = vpop.f32.mrf.mxu0
        %555 = vdwg.mxu0
        %v556 = vlaneseq
        %v557 = vand.u32 %v556, 127
        %v558 = vadd.s32 %v557, 128
        %s559 = smul.u32 %s22, 256
        %v560 = vstv %s559
        %v561 = vadd.s32 %v557, %v560
        %v562 = vadd.s32 %v558, %v560
        %v563 = vld [vmem:[%s387] sm:$0xff]
        %564 = vset.pattern.permute.xlu0 0
        %565 = vperm.xlu0 %564, %v563
        %v566 = vpop.permute.xlu0 %565
        %vm567 = vcmp.eq.s32.totalorder %v561, %v566
        %vm568 = vcmp.eq.s32.totalorder %v562, %v566
        %v569 = vsel %vm567, -1e-16, 0.0
        %v570 = vsel %vm568, -1e-16, 0.0
        %v571 = vadd.f32 %v550, %v569
        %v572 = vadd.f32 %v552, %v570
        %v573 = vmax.f32 %v571, %v572
        %574 = vmax.xlane.f32.xlu0 %v573
        %v575 = vpop.xlane.xlu0 %574
        %v576 = vld [vmem:[#allocation2] sm:$0xff]
        %v577 = vmax.f32 %v576, %v575
        %v578 = vld [vmem:[#allocation3] sm:$0xff]
        %v579 = vsub.f32 %v576, %v577
        %v580 = vmul.f32 %v579, 1.442695
        %v581 = vpow.pop %v580
        %v582 = vmul.f32 %v578, %v581
        %584 = vset.pattern.permute.xlu0 0
        %585 = vperm.xlu0 %584, %v577
        %v586 = vpop.permute.xlu0 %585
        %v588 = vsub.f32 %v571, %v586
        %v589 = vsub.f32 %v572, %v586
        %v590 = vmul.f32 %v588, 1.442695
        %v591 = vpow.pop %v590
        %v592 = vmul.f32 %v589, 1.442695
        %v593 = vpow.pop %v592
        %v594 = vadd.f32 %v591, %v593
        %595 = vadd.xlane.f32.xlu0 %v594
        %v596 = vpop.xlane.xlu0 %595
        %v597 = vadd.f32 %v582, %v596
        %vm598 = vcmask 7168
        %599 = vst.msk [vmem:[#allocation3] sm:$0xff] %vm598, %v597
        %600 = vst.msk [vmem:[#allocation2] sm:$0xff] %vm598, %v577
        %v601 = vld [vmem:[%s391] sm:$0xff]
        %vm602 = vcmp.gt.f32.partialorder %v575, %v601
        %v603 = vsel %vm602, 1.0, 0.0
        %vm604 = vcmask 31768
        %v605 = vsel %vm604, %v603, -inf
        %606 = vmax.xlane.f32.xlu0 %v605
        %v607 = vpop.xlane.xlu0 %606
        %v608 = vrot.slane %v607, 4
        %v609 = vmax.f32 %v607, %v608
        %v610 = vrot.slane %v609, 2
        %v611 = vmax.f32 %v609, %v610
        %v612 = vrot.slane %v611, 1
        %v613 = vmax.f32 %v611, %v612
        %s614 = vtos %v613
        %p615 = scmp.gt.f32.partialorder %s614, 0.0
        %p616 = por %p397, %p615
        // Predicated region
        $region79: #{body.8} parent=69 // pred_check
          %p617 = pneg %p616
        $region80: #{body.8} parent=69 // pred_check_branch
          %619 = sbr.rel (%p617) target = $region82
        $region81: #{body.8} parent=69 // pred_region
          %vm620 = vcmp.ge.f32.partialorder %v571, %v575
          %vm621 = vcmp.ge.f32.partialorder %v572, %v575
          %v622 = vsel %vm620, %v561, 1073741824
          %v623 = vsel %vm621, %v562, 1073741824
          %vm624 = vcmp.lt.s32.totalorder %v622, %v623
          %v625 = vsel %vm624, %v622, %v623
          %v626 = vand.u32 %v625, 65535
          %v627 = vshra.s32 %v625, 16
          %v628 = vcvt.s32.f32 %v626
          %v629 = vcvt.s32.f32 %v627
          %630 = vmin.xlane.f32.xlu0 %v629
          %v631 = vpop.xlane.xlu0 %630
          %vm632 = vcmp.eq.f32.partialorder %v629, %v631
          %v633 = vsel %vm632, %v628, inf
          %634 = vmin.xlane.f32.xlu0 %v633
          %v635 = vpop.xlane.xlu0 %634
          %v636 = vcvt.f32.s32 %v635
          %v637 = vcvt.f32.s32 %v631
          %v638 = vshll.u32 %v637, 16
          %v639 = vadd.s32 %v638, %v636
          %vm640 = vcmp.eq.s32.totalorder %v561, %v639
          %vm641 = vcmp.eq.s32.totalorder %v562, %v639
          %v642 = vsel %vm640, -inf, %v571
          %v643 = vsel %vm641, -inf, %v572
          %v644 = vmax.f32 %v642, %v643
          %645 = vmax.xlane.f32.xlu0 %v644
          %v646 = vpop.xlane.xlu0 %645
          %vm647 = vcmp.ge.f32.partialorder %v642, %v646
          %vm648 = vcmp.ge.f32.partialorder %v643, %v646
          %v649 = vsel %vm647, %v561, 1073741824
          %v650 = vsel %vm648, %v562, 1073741824
          %vm651 = vcmp.lt.s32.totalorder %v649, %v650
          %v652 = vsel %vm651, %v649, %v650
          %v653 = vand.u32 %v652, 65535
          %v654 = vshra.s32 %v652, 16
          %v655 = vcvt.s32.f32 %v653
          %v656 = vcvt.s32.f32 %v654
          %657 = vmin.xlane.f32.xlu0 %v656
          %v658 = vpop.xlane.xlu0 %657
          %vm659 = vcmp.eq.f32.partialorder %v656, %v658
          %v660 = vsel %vm659, %v655, inf
          %661 = vmin.xlane.f32.xlu0 %v660
          %v662 = vpop.xlane.xlu0 %661
          %v663 = vcvt.f32.s32 %v662
          %v664 = vcvt.f32.s32 %v658
          %v665 = vshll.u32 %v664, 16
          %v666 = vadd.s32 %v665, %v663
          %vm667 = vcmp.eq.s32.totalorder %v561, %v666
          %vm668 = vcmp.eq.s32.totalorder %v562, %v666
          %v669 = vsel %vm667, -inf, %v642
          %v670 = vsel %vm668, -inf, %v643
          %v671 = vmax.f32 %v669, %v670
          %672 = vmax.xlane.f32.xlu0 %v671
          %v673 = vpop.xlane.xlu0 %672
          %vm674 = vcmp.ge.f32.partialorder %v669, %v673
          %vm675 = vcmp.ge.f32.partialorder %v670, %v673
          %v676 = vsel %vm674, %v561, 1073741824
          %v677 = vsel %vm675, %v562, 1073741824
          %vm678 = vcmp.lt.s32.totalorder %v676, %v677
          %v679 = vsel %vm678, %v676, %v677
          %v680 = vand.u32 %v679, 65535
          %v681 = vshra.s32 %v679, 16
          %v682 = vcvt.s32.f32 %v680
          %v683 = vcvt.s32.f32 %v681
          %684 = vmin.xlane.f32.xlu0 %v683
          %v685 = vpop.xlane.xlu0 %684
          %vm686 = vcmp.eq.f32.partialorder %v683, %v685
          %v687 = vsel %vm686, %v682, inf
          %688 = vmin.xlane.f32.xlu0 %v687
          %v689 = vpop.xlane.xlu0 %688
          %v690 = vcvt.f32.s32 %v689
          %v691 = vcvt.f32.s32 %v685
          %v692 = vshll.u32 %v691, 16
          %v693 = vadd.s32 %v692, %v690
          %vm694 = vcmp.eq.s32.totalorder %v561, %v693
          %vm695 = vcmp.eq.s32.totalorder %v562, %v693
          %v696 = vsel %vm694, -inf, %v669
          %v697 = vsel %vm695, -inf, %v670
          %v698 = vmax.f32 %v696, %v697
          %699 = vmax.xlane.f32.xlu0 %v698
          %v700 = vpop.xlane.xlu0 %699
          %vm701 = vcmp.ge.f32.partialorder %v696, %v700
          %vm702 = vcmp.ge.f32.partialorder %v697, %v700
          %v703 = vsel %vm701, %v561, 1073741824
          %v704 = vsel %vm702, %v562, 1073741824
          %vm705 = vcmp.lt.s32.totalorder %v703, %v704
          %v706 = vsel %vm705, %v703, %v704
          %v707 = vand.u32 %v706, 65535
          %v708 = vshra.s32 %v706, 16
          %v709 = vcvt.s32.f32 %v707
          %v710 = vcvt.s32.f32 %v708
          %711 = vmin.xlane.f32.xlu0 %v710
          %v712 = vpop.xlane.xlu0 %711
          %vm713 = vcmp.eq.f32.partialorder %v710, %v712
          %v714 = vsel %vm713, %v709, inf
          %715 = vmin.xlane.f32.xlu0 %v714
          %v716 = vpop.xlane.xlu0 %715
          %v717 = vcvt.f32.s32 %v716
          %v718 = vcvt.f32.s32 %v712
          %v719 = vshll.u32 %v718, 16
          %v720 = vadd.s32 %v719, %v717
          %v721 = vld [vmem:[%s391] sm:$0xff]
          %v722 = vld [vmem:[%s395] sm:$0xff]
          %vm723 = vcmask 31744
          %v724 = vsel %vm723, %v721, %v575
          %vm725 = vcmask 39936
          %v726 = vsel %vm725, %v724, %v646
          %vm727 = vcmask 48128
          %v728 = vsel %vm727, %v726, %v673
          %vm729 = vcmask 56320
          %v730 = vsel %vm729, %v728, %v700
          %v731 = vsel %vm723, %v722, %v639
          %v732 = vsel %vm725, %v731, %v666
          %v733 = vsel %vm727, %v732, %v693
          %v734 = vsel %vm729, %v733, %v720
          %vm735 = vcmask 64512
          %v736 = vsel %vm735, %v730, -inf
          %737 = vmax.xlane.f32.xlu0 %v736
          %v738 = vpop.xlane.xlu0 %737
          %vm739 = vcmp.ge.f32.partialorder %v730, %v738
          %v740 = vsel %vm739, %v557, 1073741824
          %v741 = vsel %vm735, %v740, 2147483647
          %v742 = vand.u32 %v741, 65535
          %v743 = vshra.s32 %v741, 16
          %v744 = vcvt.s32.f32 %v742
          %v745 = vcvt.s32.f32 %v743
          %746 = vmin.xlane.f32.xlu0 %v745
          %v747 = vpop.xlane.xlu0 %746
          %vm748 = vcmp.eq.f32.partialorder %v745, %v747
          %v749 = vsel %vm748, %v744, inf
          %750 = vmin.xlane.f32.xlu0 %v749
          %v751 = vpop.xlane.xlu0 %750
          %v752 = vcvt.f32.s32 %v751
          %v753 = vcvt.f32.s32 %v747
          %v754 = vshll.u32 %v753, 16
          %v755 = vadd.s32 %v754, %v752
          %vm756 = vcmp.eq.s32.totalorder %v557, %v755
          %v757 = vsel %vm756, %v734, 0
          %v758 = vsel %vm735, %v757, 0
          %v759 = vand.u32 %v758, 65535
          %v760 = vshrl.u32 %v758, 16
          %v761 = vcvt.s32.f32 %v759
          %v762 = vcvt.s32.f32 %v760
          %763 = vadd.xlane.f32.xlu0 %v761
          %v764 = vpop.xlane.xlu0 %763
          %765 = vadd.xlane.f32.xlu0 %v762
          %v766 = vpop.xlane.xlu0 %765
          %v767 = vcvt.f32.s32 %v764
          %v768 = vcvt.f32.s32 %v766
          %v769 = vshll.u32 %v768, 16
          %v770 = vadd.s32 %v769, %v767
          %v771 = vsel %vm756, -inf, %v730
          %v772 = vsel %vm735, %v771, -inf
          %773 = vmax.xlane.f32.xlu0 %v772
          %v774 = vpop.xlane.xlu0 %773
          %vm775 = vcmp.ge.f32.partialorder %v771, %v774
          %v776 = vsel %vm775, %v557, 1073741824
          %v777 = vsel %vm735, %v776, 2147483647
          %v778 = vand.u32 %v777, 65535
          %v779 = vshra.s32 %v777, 16
          %v780 = vcvt.s32.f32 %v778
          %v781 = vcvt.s32.f32 %v779
          %782 = vmin.xlane.f32.xlu0 %v781
          %v783 = vpop.xlane.xlu0 %782
          %vm784 = vcmp.eq.f32.partialorder %v781, %v783
          %v785 = vsel %vm784, %v780, inf
          %786 = vmin.xlane.f32.xlu0 %v785
          %v787 = vpop.xlane.xlu0 %786
          %v788 = vcvt.f32.s32 %v787
          %v789 = vcvt.f32.s32 %v783
          %v790 = vshll.u32 %v789, 16
          %v791 = vadd.s32 %v790, %v788
          %vm792 = vcmp.eq.s32.totalorder %v557, %v791
          %v793 = vsel %vm792, %v734, 0
          %v794 = vsel %vm735, %v793, 0
          %v795 = vand.u32 %v794, 65535
          %v796 = vshrl.u32 %v794, 16
          %v797 = vcvt.s32.f32 %v795
          %v798 = vcvt.s32.f32 %v796
          %799 = vadd.xlane.f32.xlu0 %v797
          %v800 = vpop.xlane.xlu0 %799
          %801 = vadd.xlane.f32.xlu0 %v798
          %v802 = vpop.xlane.xlu0 %801
          %v803 = vcvt.f32.s32 %v800
          %v804 = vcvt.f32.s32 %v802
          %v805 = vshll.u32 %v804, 16
          %v806 = vadd.s32 %v805, %v803
          %v807 = vsel %vm792, -inf, %v771
          %v808 = vsel %vm735, %v807, -inf
          %809 = vmax.xlane.f32.xlu0 %v808
          %v810 = vpop.xlane.xlu0 %809
          %vm811 = vcmp.ge.f32.partialorder %v807, %v810
          %v812 = vsel %vm811, %v557, 1073741824
          %v813 = vsel %vm735, %v812, 2147483647
          %v814 = vand.u32 %v813, 65535
          %v815 = vshra.s32 %v813, 16
          %v816 = vcvt.s32.f32 %v814
          %v817 = vcvt.s32.f32 %v815
          %818 = vmin.xlane.f32.xlu0 %v817
          %v819 = vpop.xlane.xlu0 %818
          %vm820 = vcmp.eq.f32.partialorder %v817, %v819
          %v821 = vsel %vm820, %v816, inf
          %822 = vmin.xlane.f32.xlu0 %v821
          %v823 = vpop.xlane.xlu0 %822
          %v824 = vcvt.f32.s32 %v823
          %v825 = vcvt.f32.s32 %v819
          %v826 = vshll.u32 %v825, 16
          %v827 = vadd.s32 %v826, %v824
          %vm828 = vcmp.eq.s32.totalorder %v557, %v827
          %v829 = vsel %vm828, %v734, 0
          %v830 = vsel %vm735, %v829, 0
          %v831 = vand.u32 %v830, 65535
          %v832 = vshrl.u32 %v830, 16
          %v833 = vcvt.s32.f32 %v831
          %v834 = vcvt.s32.f32 %v832
          %835 = vadd.xlane.f32.xlu0 %v833
          %v836 = vpop.xlane.xlu0 %835
          %837 = vadd.xlane.f32.xlu0 %v834
          %v838 = vpop.xlane.xlu0 %837
          %v839 = vcvt.f32.s32 %v836
          %v840 = vcvt.f32.s32 %v838
          %v841 = vshll.u32 %v840, 16
          %v842 = vadd.s32 %v841, %v839
          %v843 = vsel %vm828, -inf, %v807
          %v844 = vsel %vm735, %v843, -inf
          %845 = vmax.xlane.f32.xlu0 %v844
          %v846 = vpop.xlane.xlu0 %845
          %vm847 = vcmp.ge.f32.partialorder %v843, %v846
          %v848 = vsel %vm847, %v557, 1073741824
          %v849 = vsel %vm735, %v848, 2147483647
          %v850 = vand.u32 %v849, 65535
          %v851 = vshra.s32 %v849, 16
          %v852 = vcvt.s32.f32 %v850
          %v853 = vcvt.s32.f32 %v851
          %854 = vmin.xlane.f32.xlu0 %v853
          %v855 = vpop.xlane.xlu0 %854
          %vm856 = vcmp.eq.f32.partialorder %v853, %v855
          %v857 = vsel %vm856, %v852, inf
          %858 = vmin.xlane.f32.xlu0 %v857
          %v859 = vpop.xlane.xlu0 %858
          %v860 = vcvt.f32.s32 %v859
          %v861 = vcvt.f32.s32 %v855
          %v862 = vshll.u32 %v861, 16
          %v863 = vadd.s32 %v862, %v860
          %vm864 = vcmp.eq.s32.totalorder %v557, %v863
          %v865 = vsel %vm864, %v734, 0
          %v866 = vsel %vm735, %v865, 0
          %v867 = vand.u32 %v866, 65535
          %v868 = vshrl.u32 %v866, 16
          %v869 = vcvt.s32.f32 %v867
          %v870 = vcvt.s32.f32 %v868
          %871 = vadd.xlane.f32.xlu0 %v869
          %v872 = vpop.xlane.xlu0 %871
          %873 = vadd.xlane.f32.xlu0 %v870
          %v874 = vpop.xlane.xlu0 %873
          %v875 = vcvt.f32.s32 %v872
          %v876 = vcvt.f32.s32 %v874
          %v877 = vshll.u32 %v876, 16
          %v878 = vadd.s32 %v877, %v875
          %v879 = vsel %vm598, %v738, %v774
          %vm880 = vcmask 15360
          %v881 = vsel %vm880, %v879, %v810
          %vm882 = vcmask 23552
          %v883 = vsel %vm882, %v881, %v846
          %v884 = vsel %vm723, %v883, -inf
          %885 = vst [vmem:[%s391] sm:$0xff] %v884
          %v886 = vsel %vm598, %v770, %v806
          %v887 = vsel %vm880, %v886, %v842
          %v888 = vsel %vm882, %v887, %v878
          %v889 = vsel %vm723, %v888, 0
          %890 = vst [vmem:[%s395] sm:$0xff] %v889
        $region82: #{body.8} parent=69 // pred_fallthru
          _
        %p891 = scmp.eq.s32.totalorder %s22, 3
        // Predicated region
        $region83: #{body.8} parent=69 // pred_check
          %p892 = pneg %p891
        $region84: #{body.8} parent=69 // pred_check_branch
          %894 = sbr.rel (%p892) target = $region86
        $region85: #{body.8} parent=69 // pred_region
          %v895 = vld [vmem:[#allocation2] sm:$0xff]
          %v896 = vld [vmem:[#allocation3] sm:$0xff]
          %v897 = vlog2.pop %v896
          %v898 = vmul.f32 %v897, 0.6931472
          %v899 = vadd.f32 %v895, %v898
          %v900 = vld [vmem:[%s391] sm:$0xff]
          %902 = vset.pattern.permute.xlu0 0
          %903 = vperm.xlu0 %902, %v899
          %v904 = vpop.permute.xlu0 %903
          %v906 = vsub.f32 %v900, %v904
          %907 = vst [vmem:[%s391] sm:$0xff] %v906
        $region86: #{body.8} parent=69 // pred_fallthru
          _
        %p908 = scmp.lt.s32.totalorder %s21, 0
        %s909 = scalar_select %p908, %s21, 0
        %s910 = smul.addr %s909, 8
        %s911 = scalar_lea.vmem %s4, %s910
        %p912 = scmp.lt.s32.totalorder %s21, 0
        %s913 = scalar_select %p912, %s21, 0
        %s914 = smul.addr %s913, 8
        %s915 = scalar_lea.vmem %s5, %s914
        // Predicated region
        $region87: #{body.8} parent=69 // pred_check
          %p916 = pneg %p151
        $region88: #{body.8} parent=69 // pred_check_branch
          %918 = sbr.rel (%p916) target = $region90
        $region89: #{body.8} parent=69 // pred_region
          _
        $region90: #{body.8} parent=69 // pred_fallthru
          _
        // Predicated region
        $region91: #{body.8} parent=69 // pred_check
          %p919 = pneg %p177
        $region92: #{body.8} parent=69 // pred_check_branch
          %921 = sbr.rel (%p919) target = $region94
        $region93: #{body.8} parent=69 // pred_region
          _
        $region94: #{body.8} parent=69 // pred_fallthru
          _
        // Predicated region
        $region95: #{body.8} parent=69 // pred_check
          %p922 = pneg %p151
        $region96: #{body.8} parent=69 // pred_check_branch
          %924 = sbr.rel (%p922) target = $region98
        $region97: #{body.8} parent=69 // pred_region
          %p925 = scmp.lt.s32.totalorder %s21, 0
          %s926 = scalar_select %p925, %s21, 0
          %s927 = smul.addr %s926, 8
          %s928 = scalar_lea.vmem %s4, %s927
        $region98: #{body.8} parent=69 // pred_fallthru
          _
        // Predicated region
        $region99: #{body.8} parent=69 // pred_check
          %p929 = pneg %p177
        $region100: #{body.8} parent=69 // pred_check_branch
          %931 = sbr.rel (%p929) target = $region102
        $region101: #{body.8} parent=69 // pred_region
          %p932 = scmp.lt.s32.totalorder %s21, 0
          %s933 = scalar_select %p932, %s21, 0
          %s934 = smul.addr %s933, 8
          %s935 = scalar_lea.vmem %s5, %s934
        $region102: #{body.8} parent=69 // pred_fallthru
          _
      $region70: #{body.8} parent=5 // pred_fallthru
        _
      %p936 = scmp.le.s32.totalorder 2, %s12
      // Predicated region
      $region103: #{body.8} parent=5 // pred_check
        %p937 = pneg %p936
      $region104: #{body.8} parent=5 // pred_check_branch
        %939 = sbr.rel (%p937) target = $region106
      $region105: #{body.8} parent=5 // pred_region
        %s940 = ssub.s32 %s12, 2
      $region106: #{body.8} parent=5 // pred_fallthru
        _
    $region6: #{body.8} parent=1 // loop_footer
      %s16 = sadd.s32 1, %s12
    $region7: #{body.8} parent=1 // loop_footer_branch
      %11 = sbr.rel target = $region3
    $region8: #{body.8} parent=1 // loop_exit
      _

</llo_original>
